<compile_context>
chip_gen: v5e
topology: v5e:2x2
jax: 0.10.0
libtpu: 0.0.40
codegen_flags: <defaults>
</compile_context>

<pallas_src>
import jax
import jax.numpy as jnp
from jax.experimental import pallas as pl
from jax.experimental.pallas import tpu as pltpu

IMG_SIZE = 28 * 28     # 784
HIDDEN2 = 512          # first hidden layer
HIDDEN1 = 256          # second hidden layer


def _discriminator_kernel(x_ref, w1_ref, b1_ref, w2_ref, b2_ref, w3_ref, b3_ref,
                          o_ref):
    # Layer 1: (tb, 784)bf16 @ (784, 512)bf16 -> f32 acc, + b1, LeakyReLU(0.2)
    h1 = jnp.dot(x_ref[...], w1_ref[...],
                 preferred_element_type=jnp.float32) + b1_ref[...]
    h1 = jnp.where(h1 > 0, h1, 0.2 * h1)

    # Layer 2: (tb, 512)bf16 @ (512, 256)bf16 -> f32 acc, + b2, LeakyReLU(0.2)
    h2 = jnp.dot(h1.astype(jnp.bfloat16), w2_ref[...],
                 preferred_element_type=jnp.float32) + b2_ref[...]
    h2 = jnp.where(h2 > 0, h2, 0.2 * h2)

    # Layer 3: 1-wide output. A (256,1) matmul would burn a full MXU pass for
    # one column, so do it on the VPU/XLU: broadcast-mul by the (1,256) weight
    # row and reduce over the lane axis.
    z = jnp.sum(h2 * w3_ref[...], axis=-1, keepdims=True) + b3_ref[...]

    # Sigmoid: exp on the EUP + approximate reciprocal (EUP) instead of a VPU divide.
    o_ref[...] = pl.reciprocal(1.0 + jnp.exp(-z), approx=True).astype(o_ref.dtype)


def _pick_batch_tile(B):
    """Pick a large, layout-friendly batch tile (whole batch for small B)."""
    if B <= 512:
        return B                      # single full-extent block: always legal
    for cand in (512, 384, 256, 128, 64, 32, 16, 8):
        if B % cand == 0:
            return cand
    return B                          # fallback: whole batch in one step


def discriminator_forward(x, params, *, tb=None):
    """x: (B, 784) float32. Returns (B, 1) float32 in [0, 1]."""
    w1, b1, w2, b2, w3, b3 = params
    B = x.shape[0]
    if tb is None:
        tb = _pick_batch_tile(B)
    assert B % tb == 0, "batch must be a multiple of the batch tile"

    grid = (B // tb,)

    # Cast MXU operands to bf16 (weights + activations); keep f32 accumulation,
    # biases and the final reduction/sigmoid in f32.
    x_bf = x.astype(jnp.bfloat16)
    w1_bf = w1.astype(jnp.bfloat16)
    w2_bf = w2.astype(jnp.bfloat16)

    def x_map(i):
        return (i, 0)

    def const_map(i):
        return (0, 0)

    return pl.pallas_call(
        _discriminator_kernel,
        out_shape=jax.ShapeDtypeStruct((B, 1), jnp.float32),
        grid_spec=pltpu.PrefetchScalarGridSpec(
            num_scalar_prefetch=0,
            grid=grid,
            in_specs=[
                pl.BlockSpec((tb, IMG_SIZE), x_map),           # x tile (bf16)
                pl.BlockSpec((IMG_SIZE, HIDDEN2), const_map),  # W1 (bf16)
                pl.BlockSpec((1, HIDDEN2), const_map),         # b1 (f32)
                pl.BlockSpec((HIDDEN2, HIDDEN1), const_map),   # W2 (bf16)
                pl.BlockSpec((1, HIDDEN1), const_map),         # b2 (f32)
                pl.BlockSpec((1, HIDDEN1), const_map),         # W3 row (f32)
                pl.BlockSpec((1, 1), const_map),               # b3 (f32)
            ],
            out_specs=pl.BlockSpec((tb, 1), x_map),
        ),
        compiler_params=pltpu.CompilerParams(
            dimension_semantics=("parallel",)),
    )(x_bf, w1_bf, b1, w2_bf, b2, w3, b3)


def init_params(key):
    """Deterministic init mimicking nn.Linear's uniform(-1/sqrt(fan_in), +1/sqrt(fan_in))."""
    def linear(key, fan_in, fan_out):
        kw, kb = jax.random.split(key)
        bound = 1.0 / jnp.sqrt(fan_in)
        # Stored as (in, out): transpose of PyTorch's (out, in) weight.
        w = jax.random.uniform(kw, (fan_in, fan_out), jnp.float32, -bound, bound)
        b = jax.random.uniform(kb, (1, fan_out), jnp.float32, -bound, bound)
        return w, b

    k1, k2, k3 = jax.random.split(key, 3)
    w1, b1 = linear(k1, IMG_SIZE, HIDDEN2)
    w2, b2 = linear(k2, HIDDEN2, HIDDEN1)
    w3_col, b3 = linear(k3, HIDDEN1, 1)
    w3 = w3_col.T                      # (1, 256) row, same layout as PyTorch linear3.weight
    return (w1, b1, w2, b2, w3, b3)


def _reference_forward(x, params):
    """Pure-JAX f32 reference (mirrors the PyTorch forward)."""
    w1, b1, w2, b2, w3, b3 = params
    h1 = x @ w1 + b1
    h1 = jnp.where(h1 > 0, h1, 0.2 * h1)
    h2 = h1 @ w2 + b2
    h2 = jnp.where(h2 > 0, h2, 0.2 * h2)
    z = h2 @ w3.T + b3
    return jax.nn.sigmoid(z)


if __name__ == "__main__":
    key = jax.random.PRNGKey(0)
    kp, kx = jax.random.split(key)

    params = init_params(kp)
    batch = 8
    x = jax.random.normal(kx, (batch, IMG_SIZE), jnp.float32)

    out = discriminator_forward(x, params)
    out = jax.block_until_ready(out)

    ref = _reference_forward(x, params)
    assert out.shape == (batch, 1)
    # bf16 matmul operands + approx reciprocal -> loosened tolerance vs f32 reference.
    assert jnp.allclose(out, ref, atol=2e-2, rtol=2e-2), "mismatch vs JAX reference"

    print("KERNEL_OK")
</pallas_src>

<mosaic_0001>
module attributes {stable_mosaic.version = 11 : i64} {
  func.func @_discriminator_kernel(%arg0: i32, %arg1: memref<8x784xbf16, #tpu.memory_space<vmem>>, %arg2: memref<784x512xbf16, #tpu.memory_space<vmem>>, %arg3: memref<1x512xf32, #tpu.memory_space<vmem>>, %arg4: memref<512x256xbf16, #tpu.memory_space<vmem>>, %arg5: memref<1x256xf32, #tpu.memory_space<vmem>>, %arg6: memref<1x256xf32, #tpu.memory_space<vmem>>, %arg7: memref<1x1xf32, #tpu.memory_space<vmem>>, %arg8: memref<8x1xf32, #tpu.memory_space<vmem>>) attributes {dimension_semantics = [#tpu.dimension_semantics<parallel>], iteration_bounds = array<i64: 1>, scalar_prefetch = 0 : i64, scratch_operands = 0 : i64, tpu.core_type = #tpu.core_type<tc>, window_params = [{transform_indices = @transform_0, window_bounds = array<i64: 8, 784>}, {pipeline_mode = #tpu.pipeline_mode<synchronous>, transform_indices = @transform_1, window_bounds = array<i64: 784, 512>}, {pipeline_mode = #tpu.pipeline_mode<synchronous>, transform_indices = @transform_2, window_bounds = array<i64: 1, 512>}, {pipeline_mode = #tpu.pipeline_mode<synchronous>, transform_indices = @transform_3, window_bounds = array<i64: 512, 256>}, {pipeline_mode = #tpu.pipeline_mode<synchronous>, transform_indices = @transform_4, window_bounds = array<i64: 1, 256>}, {pipeline_mode = #tpu.pipeline_mode<synchronous>, transform_indices = @transform_5, window_bounds = array<i64: 1, 256>}, {pipeline_mode = #tpu.pipeline_mode<synchronous>, transform_indices = @transform_6, window_bounds = array<i64: 1, 1>}, {transform_indices = @transform_7, window_bounds = array<i64: 8, 1>}]} {
    %c0 = arith.constant 0 : index
    %c0_0 = arith.constant 0 : index
    %0 = vector.load %arg1[%c0, %c0_0] : memref<8x784xbf16, #tpu.memory_space<vmem>>, vector<8x784xbf16>
    %c0_1 = arith.constant 0 : index
    %c0_2 = arith.constant 0 : index
    %1 = vector.load %arg2[%c0_1, %c0_2] : memref<784x512xbf16, #tpu.memory_space<vmem>>, vector<784x512xbf16>
    %cst = arith.constant dense<0.000000e+00> : vector<8x512xf32>
    %2 = tpu.matmul %0, %1, %cst {dimension_numbers = #tpu.dot_dimension_numbers<[1], [0], [0], [1], [0, 0, 1, 1], [], []>} : vector<8x784xbf16>, vector<784x512xbf16>, vector<8x512xf32> -> vector<8x512xf32>
    %c0_3 = arith.constant 0 : index
    %c0_4 = arith.constant 0 : index
    %3 = vector.load %arg3[%c0_3, %c0_4] : memref<1x512xf32, #tpu.memory_space<vmem>>, vector<1x512xf32>
    %4 = vector.broadcast %3 : vector<1x512xf32> to vector<8x512xf32>
    %5 = arith.addf %2, %4 : vector<8x512xf32>
    %cst_5 = arith.constant 0.000000e+00 : f32
    %6 = vector.broadcast %cst_5 : f32 to vector<8x512xf32>
    %7 = arith.cmpf ogt, %5, %6 : vector<8x512xf32>
    %cst_6 = arith.constant 2.000000e-01 : f32
    %8 = vector.broadcast %cst_6 : f32 to vector<8x512xf32>
    %9 = arith.mulf %8, %5 : vector<8x512xf32>
    %10 = arith.select %7, %5, %9 : vector<8x512xi1>, vector<8x512xf32>
    %11 = arith.truncf %10 : vector<8x512xf32> to vector<8x512xbf16>
    %c0_7 = arith.constant 0 : index
    %c0_8 = arith.constant 0 : index
    %12 = vector.load %arg4[%c0_7, %c0_8] : memref<512x256xbf16, #tpu.memory_space<vmem>>, vector<512x256xbf16>
    %cst_9 = arith.constant dense<0.000000e+00> : vector<8x256xf32>
    %13 = tpu.matmul %11, %12, %cst_9 {dimension_numbers = #tpu.dot_dimension_numbers<[1], [0], [0], [1], [0, 0, 1, 1], [], []>} : vector<8x512xbf16>, vector<512x256xbf16>, vector<8x256xf32> -> vector<8x256xf32>
    %c0_10 = arith.constant 0 : index
    %c0_11 = arith.constant 0 : index
    %14 = vector.load %arg5[%c0_10, %c0_11] : memref<1x256xf32, #tpu.memory_space<vmem>>, vector<1x256xf32>
    %15 = vector.broadcast %14 : vector<1x256xf32> to vector<8x256xf32>
    %16 = arith.addf %13, %15 : vector<8x256xf32>
    %cst_12 = arith.constant 0.000000e+00 : f32
    %17 = vector.broadcast %cst_12 : f32 to vector<8x256xf32>
    %18 = arith.cmpf ogt, %16, %17 : vector<8x256xf32>
    %cst_13 = arith.constant 2.000000e-01 : f32
    %19 = vector.broadcast %cst_13 : f32 to vector<8x256xf32>
    %20 = arith.mulf %19, %16 : vector<8x256xf32>
    %21 = arith.select %18, %16, %20 : vector<8x256xi1>, vector<8x256xf32>
    %c0_14 = arith.constant 0 : index
    %c0_15 = arith.constant 0 : index
    %22 = vector.load %arg6[%c0_14, %c0_15] : memref<1x256xf32, #tpu.memory_space<vmem>>, vector<1x256xf32>
    %23 = vector.broadcast %22 : vector<1x256xf32> to vector<8x256xf32>
    %24 = arith.mulf %21, %23 : vector<8x256xf32>
    %cst_16 = arith.constant dense<0.000000e+00> : vector<8xf32>
    %25 = vector.multi_reduction <add>, %24, %cst_16 [1] : vector<8x256xf32> to vector<8xf32>
    %26 = vector.shape_cast %25 : vector<8xf32> to vector<8x1xf32>
    %c0_17 = arith.constant 0 : index
    %c0_18 = arith.constant 0 : index
    %27 = vector.load %arg7[%c0_17, %c0_18] : memref<1x1xf32, #tpu.memory_space<vmem>>, vector<1x1xf32>
    %28 = vector.broadcast %27 : vector<1x1xf32> to vector<8x1xf32>
    %29 = arith.addf %26, %28 : vector<8x1xf32>
    %cst_19 = arith.constant 0.000000e+00 : f32
    %30 = vector.broadcast %cst_19 : f32 to vector<8x1xf32>
    %31 = arith.subf %30, %29 : vector<8x1xf32>
    %32 = math.exp %31 : vector<8x1xf32>
    %cst_20 = arith.constant 1.000000e+00 : f32
    %33 = vector.broadcast %cst_20 : f32 to vector<8x1xf32>
    %34 = arith.addf %33, %32 : vector<8x1xf32>
    %35 = tpu.reciprocal %34 {approx = true} : vector<8x1xf32> -> vector<8x1xf32>
    %c0_21 = arith.constant 0 : index
    %c0_22 = arith.constant 0 : index
    %36 = vector.load %arg8[%c0_21, %c0_22] : memref<8x1xf32, #tpu.memory_space<vmem>>, vector<8x1xf32>
    tpu.vector_store %arg8[%c0_21, %c0_22], %35 {strides = array<i32>} : memref<8x1xf32, #tpu.memory_space<vmem>>, vector<8x1xf32>,
    return
  }
  func.func @transform_0(%arg0: i32) -> (i32, i32) {
    %c0_i32 = arith.constant 0 : i32
    %c0_i32_0 = arith.constant 0 : i32
    return %arg0, %c0_i32 : i32, i32
  }
  func.func @transform_1(%arg0: i32) -> (i32, i32) {
    %c0_i32 = arith.constant 0 : i32
    %c0_i32_0 = arith.constant 0 : i32
    %c0_i32_1 = arith.constant 0 : i32
    return %c0_i32, %c0_i32_0 : i32, i32
  }
  func.func @transform_2(%arg0: i32) -> (i32, i32) {
    %c0_i32 = arith.constant 0 : i32
    %c0_i32_0 = arith.constant 0 : i32
    %c0_i32_1 = arith.constant 0 : i32
    return %c0_i32, %c0_i32_0 : i32, i32
  }
  func.func @transform_3(%arg0: i32) -> (i32, i32) {
    %c0_i32 = arith.constant 0 : i32
    %c0_i32_0 = arith.constant 0 : i32
    %c0_i32_1 = arith.constant 0 : i32
    return %c0_i32, %c0_i32_0 : i32, i32
  }
  func.func @transform_4(%arg0: i32) -> (i32, i32) {
    %c0_i32 = arith.constant 0 : i32
    %c0_i32_0 = arith.constant 0 : i32
    %c0_i32_1 = arith.constant 0 : i32
    return %c0_i32, %c0_i32_0 : i32, i32
  }
  func.func @transform_5(%arg0: i32) -> (i32, i32) {
    %c0_i32 = arith.constant 0 : i32
    %c0_i32_0 = arith.constant 0 : i32
    %c0_i32_1 = arith.constant 0 : i32
    return %c0_i32, %c0_i32_0 : i32, i32
  }
  func.func @transform_6(%arg0: i32) -> (i32, i32) {
    %c0_i32 = arith.constant 0 : i32
    %c0_i32_0 = arith.constant 0 : i32
    %c0_i32_1 = arith.constant 0 : i32
    return %c0_i32, %c0_i32_0 : i32, i32
  }
  func.func @transform_7(%arg0: i32) -> (i32, i32) {
    %c0_i32 = arith.constant 0 : i32
    %c0_i32_0 = arith.constant 0 : i32
    return %arg0, %c0_i32 : i32, i32
  }
}

</mosaic_0001>

<llo_original>
// kernel: tpu_custom_call.1
$region0: #{tpu_custom_call.1}
  #allocation0 [shape = 'u32[]', space=smem, size = 0x4, offset = 0x4, fixed_abs, tag = 'smem constant byte address 0x4 - core index']
  #allocation1 [shape = 'u32[72,128]{1,0:T(1,128)}', space=vmem, size = 0x9000, scoped, tag = 'internal scratch']
  #allocation2 [shape = 'f32[1,1]{1,0:T(1,128)S(1)}', space=vmem, size = 0x200, scoped, tag = 'scoped memory for tpu_custom_call.1']
  %s0 = inlined_call_operand.hbm [shape: bf16[8,784], index: 0, kind: input, shape index: {}]
  %s1 = inlined_call_operand.hbm [shape: bf16[784,512], index: 1, kind: input, shape index: {}]
  %s2 = inlined_call_operand.hbm [shape: f32[1,512], index: 2, kind: input, shape index: {}]
  %s3 = inlined_call_operand.hbm [shape: bf16[512,256], index: 3, kind: input, shape index: {}]
  %s4 = inlined_call_operand.vmem [shape: f32[1,256], index: 4, kind: input, shape index: {}]
  %s5 = inlined_call_operand.vmem [shape: f32[1,256], index: 5, kind: input, shape index: {}]
  %s6 = inlined_call_operand.<no memory space> [shape: f32[1,1], index: 6, kind: input, shape index: {}]
  %s7 = inlined_call_operand.vmem [shape: f32[8,1], index: 7, kind: output, shape index: {}]
  %s8 = sld [smem:[#allocation0]]
  $region54: #{tpu_custom_call.1} parent=0
    _
  %s10 = ssub.s32 1, %s8
  %s11 = scalar_select 0, %s10, %s8
  %v12 = vstv %s6
  %13 = vst [vmem:[#allocation2] sm:$0x1] %v12
  $region1: #{tpu_custom_call.1} parent=0
    #allocation3 [shape = 'u8[14336]{0}', space=vmem, size = 0x3800, scoped, tag = 'input window, operand 0, single buffered']
    #allocation4 [shape = 's32[1]{0}', space=sflag, size = 0x4, scoped, tag = 'scoped memory for tpu_custom_call.1']
    #allocation5 [shape = 'u8[802816]{0}', space=vmem, size = 0xc4000, scoped, tag = 'input window, operand 1, single buffered']
    #allocation6 [shape = 's32[1]{0}', space=sflag, size = 0x4, scoped, tag = 'scoped memory for tpu_custom_call.1']
    #allocation7 [shape = 'u8[2048]{0}', space=vmem, size = 0x800, scoped, tag = 'input window, operand 2, single buffered']
    #allocation8 [shape = 'u8[262144]{0}', space=vmem, size = 0x40000, scoped, tag = 'input window, operand 3, single buffered']
    #allocation9 [shape = 's32[1]{0}', space=sflag, size = 0x4, scoped, tag = 'scoped memory for tpu_custom_call.1']
    %14 = vsyncpa [#allocation4], 0
    %15 = vsyncpa [#allocation6], 0
    %16 = vsyncpa [#allocation9], 0
    // Predicated region
    $region2: #{tpu_custom_call.1} parent=1 // pred_check
      _
    $region3: #{tpu_custom_call.1} parent=1 // pred_check_branch
      %18 = sbr.rel (0) target = $region5
    $region4: #{tpu_custom_call.1} parent=1 // pred_region
      %20 = vsyncadd [#allocation4], 0
      %s22 = sshll.u32 %s0, 4
      %s23 = int_to_ptr.hbm [resolvable:$true] %s22
      %s24 = sshll.u32 [#allocation3], 4
      %s25 = int_to_ptr.vmem [resolvable:$true] %s24
      %27 = dma.hbm_to_vmem [thread:$0]  %s23, 448, %s25, [#allocation4]
    $region5: #{tpu_custom_call.1} parent=1 // pred_fallthru
      _
    // Predicated region
    $region6: #{tpu_custom_call.1} parent=1 // pred_check
      _
    $region7: #{tpu_custom_call.1} parent=1 // pred_check_branch
      %29 = sbr.rel (0) target = $region9
    $region8: #{tpu_custom_call.1} parent=1 // pred_region
      %31 = vsyncadd [#allocation6], 0
      %s32 = sshll.u32 %s1, 4
      %s33 = int_to_ptr.hbm [resolvable:$true] %s32
      %s34 = sshll.u32 [#allocation5], 4
      %s35 = int_to_ptr.vmem [resolvable:$true] %s34
      %40 = dma.hbm_to_vmem [thread:$0]  %s33, 25088, %s35, [#allocation6], 256, 256, 16
    $region9: #{tpu_custom_call.1} parent=1 // pred_fallthru
      _
    // Predicated region
    $region10: #{tpu_custom_call.1} parent=1 // pred_check
      _
    $region11: #{tpu_custom_call.1} parent=1 // pred_check_branch
      %42 = sbr.rel (0) target = $region13
    $region12: #{tpu_custom_call.1} parent=1 // pred_region
      %44 = vsyncadd [#allocation6], 0
      %s46 = sshll.u32 %s2, 4
      %s47 = int_to_ptr.hbm [resolvable:$true] %s46
      %s48 = sshll.u32 [#allocation7], 4
      %s49 = int_to_ptr.vmem [resolvable:$true] %s48
      %51 = dma.hbm_to_vmem [thread:$0]  %s47, 64, %s49, [#allocation6]
    $region13: #{tpu_custom_call.1} parent=1 // pred_fallthru
      _
    // Predicated region
    $region14: #{tpu_custom_call.1} parent=1 // pred_check
      _
    $region15: #{tpu_custom_call.1} parent=1 // pred_check_branch
      %53 = sbr.rel (0) target = $region17
    $region16: #{tpu_custom_call.1} parent=1 // pred_region
      %55 = vsyncadd [#allocation9], 0
      %s56 = sshll.u32 %s3, 4
      %s57 = int_to_ptr.hbm [resolvable:$true] %s56
      %s58 = sshll.u32 [#allocation8], 4
      %s59 = int_to_ptr.vmem [resolvable:$true] %s58
      %64 = dma.hbm_to_vmem [thread:$0]  %s57, 8192, %s59, [#allocation9], 128, 128, 8
    $region17: #{tpu_custom_call.1} parent=1 // pred_fallthru
      _
    // Predicated region
    $region18: #{tpu_custom_call.1} parent=1 // pred_check
      _
    $region19: #{tpu_custom_call.1} parent=1 // pred_check_branch
      %66 = sbr.rel (0) target = $region21
    $region20: #{tpu_custom_call.1} parent=1 // pred_region
      _
    $region21: #{tpu_custom_call.1} parent=1 // pred_fallthru
      _
    // Predicated region
    $region22: #{tpu_custom_call.1} parent=1 // pred_check
      _
    $region23: #{tpu_custom_call.1} parent=1 // pred_check_branch
      %68 = sbr.rel (0) target = $region25
    $region24: #{tpu_custom_call.1} parent=1 // pred_region
      _
    $region25: #{tpu_custom_call.1} parent=1 // pred_fallthru
      _
    // Predicated region
    $region26: #{tpu_custom_call.1} parent=1 // pred_check
      _
    $region27: #{tpu_custom_call.1} parent=1 // pred_check_branch
      %70 = sbr.rel (0) target = $region29
    $region28: #{tpu_custom_call.1} parent=1 // pred_region
      _
    $region29: #{tpu_custom_call.1} parent=1 // pred_fallthru
      _
    // Predicated region
    $region30: #{tpu_custom_call.1} parent=1 // pred_check
      _
    $region31: #{tpu_custom_call.1} parent=1 // pred_check_branch
      %72 = sbr.rel (0) target = $region33
    $region32: #{tpu_custom_call.1} parent=1 // pred_region
      %74 = dma.done [#allocation4], 448
    $region33: #{tpu_custom_call.1} parent=1 // pred_fallthru
      _
    // Predicated region
    $region34: #{tpu_custom_call.1} parent=1 // pred_check
      _
    $region35: #{tpu_custom_call.1} parent=1 // pred_check_branch
      %76 = sbr.rel (0) target = $region37
    $region36: #{tpu_custom_call.1} parent=1 // pred_region
      %78 = dma.done [#allocation6], 25088
    $region37: #{tpu_custom_call.1} parent=1 // pred_fallthru
      _
    // Predicated region
    $region38: #{tpu_custom_call.1} parent=1 // pred_check
      _
    $region39: #{tpu_custom_call.1} parent=1 // pred_check_branch
      %80 = sbr.rel (0) target = $region41
    $region40: #{tpu_custom_call.1} parent=1 // pred_region
      %82 = dma.done [#allocation6], 64
    $region41: #{tpu_custom_call.1} parent=1 // pred_fallthru
      _
    // Predicated region
    $region42: #{tpu_custom_call.1} parent=1 // pred_check
      _
    $region43: #{tpu_custom_call.1} parent=1 // pred_check_branch
      %84 = sbr.rel (0) target = $region45
    $region44: #{tpu_custom_call.1} parent=1 // pred_region
      %86 = dma.done [#allocation9], 8192
    $region45: #{tpu_custom_call.1} parent=1 // pred_fallthru
      _
    %v88 = vld [vmem:[#allocation3] sm:$0xff]
    %v89 = vld [vmem:[#allocation3 + $0x8] sm:$0xff]
    %v90 = vld [vmem:[#allocation3 + $0x10] sm:$0xff]
    %v91 = vld [vmem:[#allocation3 + $0x18] sm:$0xf]
    %v92 = vld [vmem:[#allocation5] sm:$0xff]
    %v93 = vld [vmem:[#allocation5 + $0x8] sm:$0xff]
    %v94 = vld [vmem:[#allocation5 + $0x10] sm:$0xff]
    %v95 = vld [vmem:[#allocation5 + $0x18] sm:$0xff]
    %v96 = vld [vmem:[#allocation5 + $0x20] sm:$0xff]
    %v97 = vld [vmem:[#allocation5 + $0x28] sm:$0xff]
    %v98 = vld [vmem:[#allocation5 + $0x30] sm:$0xff]
    %v99 = vld [vmem:[#allocation5 + $0x38] sm:$0xff]
    %v100 = vld [vmem:[#allocation5 + $0x40] sm:$0xff]
    %v101 = vld [vmem:[#allocation5 + $0x48] sm:$0xff]
    %v102 = vld [vmem:[#allocation5 + $0x50] sm:$0xff]
    %v103 = vld [vmem:[#allocation5 + $0x58] sm:$0xff]
    %v104 = vld [vmem:[#allocation5 + $0x60] sm:$0xff]
    %v105 = vld [vmem:[#allocation5 + $0x68] sm:$0xff]
    %v106 = vld [vmem:[#allocation5 + $0x70] sm:$0xff]
    %v107 = vld [vmem:[#allocation5 + $0x78] sm:$0xff]
    %v108 = vld [vmem:[#allocation5 + $0x80] sm:$0xff]
    %v109 = vld [vmem:[#allocation5 + $0x88] sm:$0xff]
    %v110 = vld [vmem:[#allocation5 + $0x90] sm:$0xff]
    %v111 = vld [vmem:[#allocation5 + $0x98] sm:$0xff]
    %v112 = vld [vmem:[#allocation5 + $0xa0] sm:$0xff]
    %v113 = vld [vmem:[#allocation5 + $0xa8] sm:$0xff]
    %v114 = vld [vmem:[#allocation5 + $0xb0] sm:$0xff]
    %v115 = vld [vmem:[#allocation5 + $0xb8] sm:$0xff]
    %v116 = vld [vmem:[#allocation5 + $0xc0] sm:$0xff]
    %v117 = vld [vmem:[#allocation5 + $0xc8] sm:$0xff]
    %v118 = vld [vmem:[#allocation5 + $0xd0] sm:$0xff]
    %v119 = vld [vmem:[#allocation5 + $0xd8] sm:$0xff]
    %v120 = vld [vmem:[#allocation5 + $0xe0] sm:$0xff]
    %v121 = vld [vmem:[#allocation5 + $0xe8] sm:$0xff]
    %v122 = vld [vmem:[#allocation5 + $0xf0] sm:$0xff]
    %v123 = vld [vmem:[#allocation5 + $0xf8] sm:$0xff]
    %v124 = vld [vmem:[#allocation5 + $0x100] sm:$0xff]
    %v125 = vld [vmem:[#allocation5 + $0x108] sm:$0xff]
    %v126 = vld [vmem:[#allocation5 + $0x110] sm:$0xff]
    %v127 = vld [vmem:[#allocation5 + $0x118] sm:$0xff]
    %v128 = vld [vmem:[#allocation5 + $0x120] sm:$0xff]
    %v129 = vld [vmem:[#allocation5 + $0x128] sm:$0xff]
    %v130 = vld [vmem:[#allocation5 + $0x130] sm:$0xff]
    %v131 = vld [vmem:[#allocation5 + $0x138] sm:$0xff]
    %v132 = vld [vmem:[#allocation5 + $0x140] sm:$0xff]
    %v133 = vld [vmem:[#allocation5 + $0x148] sm:$0xff]
    %v134 = vld [vmem:[#allocation5 + $0x150] sm:$0xff]
    %v135 = vld [vmem:[#allocation5 + $0x158] sm:$0xff]
    %v136 = vld [vmem:[#allocation5 + $0x160] sm:$0xff]
    %v137 = vld [vmem:[#allocation5 + $0x168] sm:$0xff]
    %v138 = vld [vmem:[#allocation5 + $0x170] sm:$0xff]
    %v139 = vld [vmem:[#allocation5 + $0x178] sm:$0xff]
    %v140 = vld [vmem:[#allocation5 + $0x180] sm:$0xff]
    %v141 = vld [vmem:[#allocation5 + $0x188] sm:$0xff]
    %v142 = vld [vmem:[#allocation5 + $0x190] sm:$0xff]
    %v143 = vld [vmem:[#allocation5 + $0x198] sm:$0xff]
    %v144 = vld [vmem:[#allocation5 + $0x1a0] sm:$0xff]
    %v145 = vld [vmem:[#allocation5 + $0x1a8] sm:$0xff]
    %v146 = vld [vmem:[#allocation5 + $0x1b0] sm:$0xff]
    %v147 = vld [vmem:[#allocation5 + $0x1b8] sm:$0xff]
    %v148 = vld [vmem:[#allocation5 + $0x1c0] sm:$0xff]
    %v149 = vld [vmem:[#allocation5 + $0x1c8] sm:$0xff]
    %v150 = vld [vmem:[#allocation5 + $0x1d0] sm:$0xff]
    %v151 = vld [vmem:[#allocation5 + $0x1d8] sm:$0xff]
    %v152 = vld [vmem:[#allocation5 + $0x1e0] sm:$0xff]
    %v153 = vld [vmem:[#allocation5 + $0x1e8] sm:$0xff]
    %v154 = vld [vmem:[#allocation5 + $0x1f0] sm:$0xff]
    %v155 = vld [vmem:[#allocation5 + $0x1f8] sm:$0xff]
    %v156 = vld [vmem:[#allocation5 + $0x200] sm:$0xff]
    %v157 = vld [vmem:[#allocation5 + $0x208] sm:$0xff]
    %v158 = vld [vmem:[#allocation5 + $0x210] sm:$0xff]
    %v159 = vld [vmem:[#allocation5 + $0x218] sm:$0xff]
    %v160 = vld [vmem:[#allocation5 + $0x220] sm:$0xff]
    %v161 = vld [vmem:[#allocation5 + $0x228] sm:$0xff]
    %v162 = vld [vmem:[#allocation5 + $0x230] sm:$0xff]
    %v163 = vld [vmem:[#allocation5 + $0x238] sm:$0xff]
    %v164 = vld [vmem:[#allocation5 + $0x240] sm:$0xff]
    %v165 = vld [vmem:[#allocation5 + $0x248] sm:$0xff]
    %v166 = vld [vmem:[#allocation5 + $0x250] sm:$0xff]
    %v167 = vld [vmem:[#allocation5 + $0x258] sm:$0xff]
    %v168 = vld [vmem:[#allocation5 + $0x260] sm:$0xff]
    %v169 = vld [vmem:[#allocation5 + $0x268] sm:$0xff]
    %v170 = vld [vmem:[#allocation5 + $0x270] sm:$0xff]
    %v171 = vld [vmem:[#allocation5 + $0x278] sm:$0xff]
    %v172 = vld [vmem:[#allocation5 + $0x280] sm:$0xff]
    %v173 = vld [vmem:[#allocation5 + $0x288] sm:$0xff]
    %v174 = vld [vmem:[#allocation5 + $0x290] sm:$0xff]
    %v175 = vld [vmem:[#allocation5 + $0x298] sm:$0xff]
    %v176 = vld [vmem:[#allocation5 + $0x2a0] sm:$0xff]
    %v177 = vld [vmem:[#allocation5 + $0x2a8] sm:$0xff]
    %v178 = vld [vmem:[#allocation5 + $0x2b0] sm:$0xff]
    %v179 = vld [vmem:[#allocation5 + $0x2b8] sm:$0xff]
    %v180 = vld [vmem:[#allocation5 + $0x2c0] sm:$0xff]
    %v181 = vld [vmem:[#allocation5 + $0x2c8] sm:$0xff]
    %v182 = vld [vmem:[#allocation5 + $0x2d0] sm:$0xff]
    %v183 = vld [vmem:[#allocation5 + $0x2d8] sm:$0xff]
    %v184 = vld [vmem:[#allocation5 + $0x2e0] sm:$0xff]
    %v185 = vld [vmem:[#allocation5 + $0x2e8] sm:$0xff]
    %v186 = vld [vmem:[#allocation5 + $0x2f0] sm:$0xff]
    %v187 = vld [vmem:[#allocation5 + $0x2f8] sm:$0xff]
    %v188 = vld [vmem:[#allocation5 + $0x300] sm:$0xff]
    %v189 = vld [vmem:[#allocation5 + $0x308] sm:$0xff]
    %v190 = vld [vmem:[#allocation5 + $0x310] sm:$0xff]
    %v191 = vld [vmem:[#allocation5 + $0x318] sm:$0xff]
    %v192 = vld [vmem:[#allocation5 + $0x320] sm:$0xff]
    %v193 = vld [vmem:[#allocation5 + $0x328] sm:$0xff]
    %v194 = vld [vmem:[#allocation5 + $0x330] sm:$0xff]
    %v195 = vld [vmem:[#allocation5 + $0x338] sm:$0xff]
    %v196 = vld [vmem:[#allocation5 + $0x340] sm:$0xff]
    %v197 = vld [vmem:[#allocation5 + $0x348] sm:$0xff]
    %v198 = vld [vmem:[#allocation5 + $0x350] sm:$0xff]
    %v199 = vld [vmem:[#allocation5 + $0x358] sm:$0xff]
    %v200 = vld [vmem:[#allocation5 + $0x360] sm:$0xff]
    %v201 = vld [vmem:[#allocation5 + $0x368] sm:$0xff]
    %v202 = vld [vmem:[#allocation5 + $0x370] sm:$0xff]
    %v203 = vld [vmem:[#allocation5 + $0x378] sm:$0xff]
    %v204 = vld [vmem:[#allocation5 + $0x380] sm:$0xff]
    %v205 = vld [vmem:[#allocation5 + $0x388] sm:$0xff]
    %v206 = vld [vmem:[#allocation5 + $0x390] sm:$0xff]
    %v207 = vld [vmem:[#allocation5 + $0x398] sm:$0xff]
    %v208 = vld [vmem:[#allocation5 + $0x3a0] sm:$0xff]
    %v209 = vld [vmem:[#allocation5 + $0x3a8] sm:$0xff]
    %v210 = vld [vmem:[#allocation5 + $0x3b0] sm:$0xff]
    %v211 = vld [vmem:[#allocation5 + $0x3b8] sm:$0xff]
    %v212 = vld [vmem:[#allocation5 + $0x3c0] sm:$0xff]
    %v213 = vld [vmem:[#allocation5 + $0x3c8] sm:$0xff]
    %v214 = vld [vmem:[#allocation5 + $0x3d0] sm:$0xff]
    %v215 = vld [vmem:[#allocation5 + $0x3d8] sm:$0xff]
    %v216 = vld [vmem:[#allocation5 + $0x3e0] sm:$0xff]
    %v217 = vld [vmem:[#allocation5 + $0x3e8] sm:$0xff]
    %v218 = vld [vmem:[#allocation5 + $0x3f0] sm:$0xff]
    %v219 = vld [vmem:[#allocation5 + $0x3f8] sm:$0xff]
    %v220 = vld [vmem:[#allocation5 + $0x400] sm:$0xff]
    %v221 = vld [vmem:[#allocation5 + $0x408] sm:$0xff]
    %v222 = vld [vmem:[#allocation5 + $0x410] sm:$0xff]
    %v223 = vld [vmem:[#allocation5 + $0x418] sm:$0xff]
    %v224 = vld [vmem:[#allocation5 + $0x420] sm:$0xff]
    %v225 = vld [vmem:[#allocation5 + $0x428] sm:$0xff]
    %v226 = vld [vmem:[#allocation5 + $0x430] sm:$0xff]
    %v227 = vld [vmem:[#allocation5 + $0x438] sm:$0xff]
    %v228 = vld [vmem:[#allocation5 + $0x440] sm:$0xff]
    %v229 = vld [vmem:[#allocation5 + $0x448] sm:$0xff]
    %v230 = vld [vmem:[#allocation5 + $0x450] sm:$0xff]
    %v231 = vld [vmem:[#allocation5 + $0x458] sm:$0xff]
    %v232 = vld [vmem:[#allocation5 + $0x460] sm:$0xff]
    %v233 = vld [vmem:[#allocation5 + $0x468] sm:$0xff]
    %v234 = vld [vmem:[#allocation5 + $0x470] sm:$0xff]
    %v235 = vld [vmem:[#allocation5 + $0x478] sm:$0xff]
    %v236 = vld [vmem:[#allocation5 + $0x480] sm:$0xff]
    %v237 = vld [vmem:[#allocation5 + $0x488] sm:$0xff]
    %v238 = vld [vmem:[#allocation5 + $0x490] sm:$0xff]
    %v239 = vld [vmem:[#allocation5 + $0x498] sm:$0xff]
    %v240 = vld [vmem:[#allocation5 + $0x4a0] sm:$0xff]
    %v241 = vld [vmem:[#allocation5 + $0x4a8] sm:$0xff]
    %v242 = vld [vmem:[#allocation5 + $0x4b0] sm:$0xff]
    %v243 = vld [vmem:[#allocation5 + $0x4b8] sm:$0xff]
    %v244 = vld [vmem:[#allocation5 + $0x4c0] sm:$0xff]
    %v245 = vld [vmem:[#allocation5 + $0x4c8] sm:$0xff]
    %v246 = vld [vmem:[#allocation5 + $0x4d0] sm:$0xff]
    %v247 = vld [vmem:[#allocation5 + $0x4d8] sm:$0xff]
    %v248 = vld [vmem:[#allocation5 + $0x4e0] sm:$0xff]
    %v249 = vld [vmem:[#allocation5 + $0x4e8] sm:$0xff]
    %v250 = vld [vmem:[#allocation5 + $0x4f0] sm:$0xff]
    %v251 = vld [vmem:[#allocation5 + $0x4f8] sm:$0xff]
    %v252 = vld [vmem:[#allocation5 + $0x500] sm:$0xff]
    %v253 = vld [vmem:[#allocation5 + $0x508] sm:$0xff]
    %v254 = vld [vmem:[#allocation5 + $0x510] sm:$0xff]
    %v255 = vld [vmem:[#allocation5 + $0x518] sm:$0xff]
    %v256 = vld [vmem:[#allocation5 + $0x520] sm:$0xff]
    %v257 = vld [vmem:[#allocation5 + $0x528] sm:$0xff]
    %v258 = vld [vmem:[#allocation5 + $0x530] sm:$0xff]
    %v259 = vld [vmem:[#allocation5 + $0x538] sm:$0xff]
    %v260 = vld [vmem:[#allocation5 + $0x540] sm:$0xff]
    %v261 = vld [vmem:[#allocation5 + $0x548] sm:$0xff]
    %v262 = vld [vmem:[#allocation5 + $0x550] sm:$0xff]
    %v263 = vld [vmem:[#allocation5 + $0x558] sm:$0xff]
    %v264 = vld [vmem:[#allocation5 + $0x560] sm:$0xff]
    %v265 = vld [vmem:[#allocation5 + $0x568] sm:$0xff]
    %v266 = vld [vmem:[#allocation5 + $0x570] sm:$0xff]
    %v267 = vld [vmem:[#allocation5 + $0x578] sm:$0xff]
    %v268 = vld [vmem:[#allocation5 + $0x580] sm:$0xff]
    %v269 = vld [vmem:[#allocation5 + $0x588] sm:$0xff]
    %v270 = vld [vmem:[#allocation5 + $0x590] sm:$0xff]
    %v271 = vld [vmem:[#allocation5 + $0x598] sm:$0xff]
    %v272 = vld [vmem:[#allocation5 + $0x5a0] sm:$0xff]
    %v273 = vld [vmem:[#allocation5 + $0x5a8] sm:$0xff]
    %v274 = vld [vmem:[#allocation5 + $0x5b0] sm:$0xff]
    %v275 = vld [vmem:[#allocation5 + $0x5b8] sm:$0xff]
    %v276 = vld [vmem:[#allocation5 + $0x5c0] sm:$0xff]
    %v277 = vld [vmem:[#allocation5 + $0x5c8] sm:$0xff]
    %v278 = vld [vmem:[#allocation5 + $0x5d0] sm:$0xff]
    %v279 = vld [vmem:[#allocation5 + $0x5d8] sm:$0xff]
    %v280 = vld [vmem:[#allocation5 + $0x5e0] sm:$0xff]
    %v281 = vld [vmem:[#allocation5 + $0x5e8] sm:$0xff]
    %v282 = vld [vmem:[#allocation5 + $0x5f0] sm:$0xff]
    %v283 = vld [vmem:[#allocation5 + $0x5f8] sm:$0xff]
    %v284 = vld [vmem:[#allocation5 + $0x600] sm:$0xff]
    %v285 = vld [vmem:[#allocation5 + $0x608] sm:$0xff]
    %v286 = vld [vmem:[#allocation5 + $0x610] sm:$0xff]
    %v287 = vld [vmem:[#allocation5 + $0x618] sm:$0xff]
    %v288 = vld [vmem:[#allocation7] sm:$0xf]
    %v290 = vperm.slane %v288, 0
    %v291 = vperm.slane %v288, 1
    %v292 = vperm.slane %v288, 2
    %v293 = vperm.slane %v288, 3
    %v302 = vunpack.c.l.b16 %v88
    %v303 = vunpack.c.h.b16 %v88
    %v304 = vunpack.c.l.b16 %v89
    %v305 = vunpack.c.h.b16 %v89
    %v306 = vunpack.c.l.b16 %v90
    %v307 = vunpack.c.h.b16 %v90
    %v308 = vunpack.c.l.b16 %v91
    %v309 = vpack.c.b16 %v302, %v302
    %v310 = vpack.c.b16 %v303, %v303
    %v311 = vpack.c.b16 %v304, %v304
    %v312 = vpack.c.b16 %v305, %v305
    %v313 = vpack.c.b16 %v306, %v306
    %v314 = vpack.c.b16 %v307, %v307
    %v315 = vpack.c.b16 %v308, %v308
    %v518 = vunpack.c.l.b16 %v92
    %v519 = vunpack.c.h.b16 %v92
    %v520 = vunpack.c.l.b16 %v93
    %v521 = vunpack.c.h.b16 %v93
    %v522 = vunpack.c.l.b16 %v94
    %v523 = vunpack.c.h.b16 %v94
    %v524 = vunpack.c.l.b16 %v95
    %v525 = vunpack.c.h.b16 %v95
    %v526 = vunpack.c.l.b16 %v96
    %v527 = vunpack.c.h.b16 %v96
    %v528 = vunpack.c.l.b16 %v97
    %v529 = vunpack.c.h.b16 %v97
    %v530 = vunpack.c.l.b16 %v98
    %v531 = vunpack.c.h.b16 %v98
    %v532 = vunpack.c.l.b16 %v99
    %v533 = vunpack.c.h.b16 %v99
    %v534 = vunpack.c.l.b16 %v100
    %v535 = vunpack.c.h.b16 %v100
    %v536 = vunpack.c.l.b16 %v101
    %v537 = vunpack.c.h.b16 %v101
    %v538 = vunpack.c.l.b16 %v102
    %v539 = vunpack.c.h.b16 %v102
    %v540 = vunpack.c.l.b16 %v103
    %v541 = vunpack.c.h.b16 %v103
    %v542 = vunpack.c.l.b16 %v104
    %v543 = vunpack.c.h.b16 %v104
    %v544 = vunpack.c.l.b16 %v105
    %v545 = vunpack.c.h.b16 %v105
    %v546 = vunpack.c.l.b16 %v106
    %v547 = vunpack.c.h.b16 %v106
    %v548 = vunpack.c.l.b16 %v107
    %v549 = vunpack.c.h.b16 %v107
    %v550 = vunpack.c.l.b16 %v108
    %v551 = vunpack.c.h.b16 %v108
    %v552 = vunpack.c.l.b16 %v109
    %v553 = vunpack.c.h.b16 %v109
    %v554 = vunpack.c.l.b16 %v110
    %v555 = vunpack.c.h.b16 %v110
    %v556 = vunpack.c.l.b16 %v111
    %v557 = vunpack.c.h.b16 %v111
    %v558 = vunpack.c.l.b16 %v112
    %v559 = vunpack.c.h.b16 %v112
    %v560 = vunpack.c.l.b16 %v113
    %v561 = vunpack.c.h.b16 %v113
    %v562 = vunpack.c.l.b16 %v114
    %v563 = vunpack.c.h.b16 %v114
    %v564 = vunpack.c.l.b16 %v115
    %v565 = vunpack.c.h.b16 %v115
    %v566 = vunpack.c.l.b16 %v116
    %v567 = vunpack.c.h.b16 %v116
    %v568 = vunpack.c.l.b16 %v117
    %v569 = vunpack.c.h.b16 %v117
    %v570 = vunpack.c.l.b16 %v118
    %v571 = vunpack.c.h.b16 %v118
    %v572 = vunpack.c.l.b16 %v119
    %v573 = vunpack.c.h.b16 %v119
    %v574 = vunpack.c.l.b16 %v120
    %v575 = vunpack.c.h.b16 %v120
    %v576 = vunpack.c.l.b16 %v121
    %v577 = vunpack.c.h.b16 %v121
    %v578 = vunpack.c.l.b16 %v122
    %v579 = vunpack.c.h.b16 %v122
    %v580 = vunpack.c.l.b16 %v123
    %v581 = vunpack.c.h.b16 %v123
    %v582 = vunpack.c.l.b16 %v124
    %v583 = vunpack.c.h.b16 %v124
    %v584 = vunpack.c.l.b16 %v125
    %v585 = vunpack.c.h.b16 %v125
    %v586 = vunpack.c.l.b16 %v126
    %v587 = vunpack.c.h.b16 %v126
    %v588 = vunpack.c.l.b16 %v127
    %v589 = vunpack.c.h.b16 %v127
    %v590 = vunpack.c.l.b16 %v128
    %v591 = vunpack.c.h.b16 %v128
    %v592 = vunpack.c.l.b16 %v129
    %v593 = vunpack.c.h.b16 %v129
    %v594 = vunpack.c.l.b16 %v130
    %v595 = vunpack.c.h.b16 %v130
    %v596 = vunpack.c.l.b16 %v131
    %v597 = vunpack.c.h.b16 %v131
    %v598 = vunpack.c.l.b16 %v132
    %v599 = vunpack.c.h.b16 %v132
    %v600 = vunpack.c.l.b16 %v133
    %v601 = vunpack.c.h.b16 %v133
    %v602 = vunpack.c.l.b16 %v134
    %v603 = vunpack.c.h.b16 %v134
    %v604 = vunpack.c.l.b16 %v135
    %v605 = vunpack.c.h.b16 %v135
    %v606 = vunpack.c.l.b16 %v136
    %v607 = vunpack.c.h.b16 %v136
    %v608 = vunpack.c.l.b16 %v137
    %v609 = vunpack.c.h.b16 %v137
    %v610 = vunpack.c.l.b16 %v138
    %v611 = vunpack.c.h.b16 %v138
    %v612 = vunpack.c.l.b16 %v139
    %v613 = vunpack.c.h.b16 %v139
    %v614 = vunpack.c.l.b16 %v140
    %v615 = vunpack.c.h.b16 %v140
    %v616 = vunpack.c.l.b16 %v141
    %v617 = vunpack.c.h.b16 %v141
    %v618 = vunpack.c.l.b16 %v142
    %v619 = vunpack.c.h.b16 %v142
    %v620 = vunpack.c.l.b16 %v143
    %v621 = vunpack.c.h.b16 %v143
    %v622 = vunpack.c.l.b16 %v144
    %v623 = vunpack.c.h.b16 %v144
    %v624 = vunpack.c.l.b16 %v145
    %v625 = vunpack.c.h.b16 %v145
    %v626 = vunpack.c.l.b16 %v146
    %v627 = vunpack.c.h.b16 %v146
    %v628 = vunpack.c.l.b16 %v147
    %v629 = vunpack.c.h.b16 %v147
    %v630 = vunpack.c.l.b16 %v148
    %v631 = vunpack.c.h.b16 %v148
    %v632 = vunpack.c.l.b16 %v149
    %v633 = vunpack.c.h.b16 %v149
    %v634 = vunpack.c.l.b16 %v150
    %v635 = vunpack.c.h.b16 %v150
    %v636 = vunpack.c.l.b16 %v151
    %v637 = vunpack.c.h.b16 %v151
    %v638 = vunpack.c.l.b16 %v152
    %v639 = vunpack.c.h.b16 %v152
    %v640 = vunpack.c.l.b16 %v153
    %v641 = vunpack.c.h.b16 %v153
    %v642 = vunpack.c.l.b16 %v154
    %v643 = vunpack.c.h.b16 %v154
    %v644 = vunpack.c.l.b16 %v155
    %v645 = vunpack.c.h.b16 %v155
    %v646 = vunpack.c.l.b16 %v156
    %v647 = vunpack.c.h.b16 %v156
    %v648 = vunpack.c.l.b16 %v157
    %v649 = vunpack.c.h.b16 %v157
    %v650 = vunpack.c.l.b16 %v158
    %v651 = vunpack.c.h.b16 %v158
    %v652 = vunpack.c.l.b16 %v159
    %v653 = vunpack.c.h.b16 %v159
    %v654 = vunpack.c.l.b16 %v160
    %v655 = vunpack.c.h.b16 %v160
    %v656 = vunpack.c.l.b16 %v161
    %v657 = vunpack.c.h.b16 %v161
    %v658 = vunpack.c.l.b16 %v162
    %v659 = vunpack.c.h.b16 %v162
    %v660 = vunpack.c.l.b16 %v163
    %v661 = vunpack.c.h.b16 %v163
    %v662 = vunpack.c.l.b16 %v164
    %v663 = vunpack.c.h.b16 %v164
    %v664 = vunpack.c.l.b16 %v165
    %v665 = vunpack.c.h.b16 %v165
    %v666 = vunpack.c.l.b16 %v166
    %v667 = vunpack.c.h.b16 %v166
    %v668 = vunpack.c.l.b16 %v167
    %v669 = vunpack.c.h.b16 %v167
    %v670 = vunpack.c.l.b16 %v168
    %v671 = vunpack.c.h.b16 %v168
    %v672 = vunpack.c.l.b16 %v169
    %v673 = vunpack.c.h.b16 %v169
    %v674 = vunpack.c.l.b16 %v170
    %v675 = vunpack.c.h.b16 %v170
    %v676 = vunpack.c.l.b16 %v171
    %v677 = vunpack.c.h.b16 %v171
    %v678 = vunpack.c.l.b16 %v172
    %v679 = vunpack.c.h.b16 %v172
    %v680 = vunpack.c.l.b16 %v173
    %v681 = vunpack.c.h.b16 %v173
    %v682 = vunpack.c.l.b16 %v174
    %v683 = vunpack.c.h.b16 %v174
    %v684 = vunpack.c.l.b16 %v175
    %v685 = vunpack.c.h.b16 %v175
    %v686 = vunpack.c.l.b16 %v176
    %v687 = vunpack.c.h.b16 %v176
    %v688 = vunpack.c.l.b16 %v177
    %v689 = vunpack.c.h.b16 %v177
    %v690 = vunpack.c.l.b16 %v178
    %v691 = vunpack.c.h.b16 %v178
    %v692 = vunpack.c.l.b16 %v179
    %v693 = vunpack.c.h.b16 %v179
    %v694 = vunpack.c.l.b16 %v180
    %v695 = vunpack.c.h.b16 %v180
    %v696 = vunpack.c.l.b16 %v181
    %v697 = vunpack.c.h.b16 %v181
    %v698 = vunpack.c.l.b16 %v182
    %v699 = vunpack.c.h.b16 %v182
    %v700 = vunpack.c.l.b16 %v183
    %v701 = vunpack.c.h.b16 %v183
    %v702 = vunpack.c.l.b16 %v184
    %v703 = vunpack.c.h.b16 %v184
    %v704 = vunpack.c.l.b16 %v185
    %v705 = vunpack.c.h.b16 %v185
    %v706 = vunpack.c.l.b16 %v186
    %v707 = vunpack.c.h.b16 %v186
    %v708 = vunpack.c.l.b16 %v187
    %v709 = vunpack.c.h.b16 %v187
    %v710 = vunpack.c.l.b16 %v188
    %v711 = vunpack.c.h.b16 %v188
    %v712 = vunpack.c.l.b16 %v189
    %v713 = vunpack.c.h.b16 %v189
    %v714 = vunpack.c.l.b16 %v190
    %v715 = vunpack.c.h.b16 %v190
    %v716 = vunpack.c.l.b16 %v191
    %v717 = vunpack.c.h.b16 %v191
    %v718 = vunpack.c.l.b16 %v192
    %v719 = vunpack.c.h.b16 %v192
    %v720 = vunpack.c.l.b16 %v193
    %v721 = vunpack.c.h.b16 %v193
    %v722 = vunpack.c.l.b16 %v194
    %v723 = vunpack.c.h.b16 %v194
    %v724 = vunpack.c.l.b16 %v195
    %v725 = vunpack.c.h.b16 %v195
    %v726 = vunpack.c.l.b16 %v196
    %v727 = vunpack.c.h.b16 %v196
    %v728 = vunpack.c.l.b16 %v197
    %v729 = vunpack.c.h.b16 %v197
    %v730 = vunpack.c.l.b16 %v198
    %v731 = vunpack.c.h.b16 %v198
    %v732 = vunpack.c.l.b16 %v199
    %v733 = vunpack.c.h.b16 %v199
    %v734 = vunpack.c.l.b16 %v200
    %v735 = vunpack.c.h.b16 %v200
    %v736 = vunpack.c.l.b16 %v201
    %v737 = vunpack.c.h.b16 %v201
    %v738 = vunpack.c.l.b16 %v202
    %v739 = vunpack.c.h.b16 %v202
    %v740 = vunpack.c.l.b16 %v203
    %v741 = vunpack.c.h.b16 %v203
    %v742 = vunpack.c.l.b16 %v204
    %v743 = vunpack.c.h.b16 %v204
    %v744 = vunpack.c.l.b16 %v205
    %v745 = vunpack.c.h.b16 %v205
    %v746 = vunpack.c.l.b16 %v206
    %v747 = vunpack.c.h.b16 %v206
    %v748 = vunpack.c.l.b16 %v207
    %v749 = vunpack.c.h.b16 %v207
    %v750 = vunpack.c.l.b16 %v208
    %v751 = vunpack.c.h.b16 %v208
    %v752 = vunpack.c.l.b16 %v209
    %v753 = vunpack.c.h.b16 %v209
    %v754 = vunpack.c.l.b16 %v210
    %v755 = vunpack.c.h.b16 %v210
    %v756 = vunpack.c.l.b16 %v211
    %v757 = vunpack.c.h.b16 %v211
    %v758 = vunpack.c.l.b16 %v212
    %v759 = vunpack.c.h.b16 %v212
    %v760 = vunpack.c.l.b16 %v213
    %v761 = vunpack.c.h.b16 %v213
    %v762 = vunpack.c.l.b16 %v214
    %v763 = vunpack.c.h.b16 %v214
    %v764 = vunpack.c.l.b16 %v215
    %v765 = vunpack.c.h.b16 %v215
    %v766 = vunpack.c.l.b16 %v216
    %v767 = vunpack.c.h.b16 %v216
    %v768 = vunpack.c.l.b16 %v217
    %v769 = vunpack.c.h.b16 %v217
    %v770 = vunpack.c.l.b16 %v218
    %v771 = vunpack.c.h.b16 %v218
    %v772 = vunpack.c.l.b16 %v219
    %v773 = vunpack.c.h.b16 %v219
    %v774 = vunpack.c.l.b16 %v220
    %v775 = vunpack.c.h.b16 %v220
    %v776 = vunpack.c.l.b16 %v221
    %v777 = vunpack.c.h.b16 %v221
    %v778 = vunpack.c.l.b16 %v222
    %v779 = vunpack.c.h.b16 %v222
    %v780 = vunpack.c.l.b16 %v223
    %v781 = vunpack.c.h.b16 %v223
    %v782 = vunpack.c.l.b16 %v224
    %v783 = vunpack.c.h.b16 %v224
    %v784 = vunpack.c.l.b16 %v225
    %v785 = vunpack.c.h.b16 %v225
    %v786 = vunpack.c.l.b16 %v226
    %v787 = vunpack.c.h.b16 %v226
    %v788 = vunpack.c.l.b16 %v227
    %v789 = vunpack.c.h.b16 %v227
    %v790 = vunpack.c.l.b16 %v228
    %v791 = vunpack.c.h.b16 %v228
    %v792 = vunpack.c.l.b16 %v229
    %v793 = vunpack.c.h.b16 %v229
    %v794 = vunpack.c.l.b16 %v230
    %v795 = vunpack.c.h.b16 %v230
    %v796 = vunpack.c.l.b16 %v231
    %v797 = vunpack.c.h.b16 %v231
    %v798 = vunpack.c.l.b16 %v232
    %v799 = vunpack.c.h.b16 %v232
    %v800 = vunpack.c.l.b16 %v233
    %v801 = vunpack.c.h.b16 %v233
    %v802 = vunpack.c.l.b16 %v234
    %v803 = vunpack.c.h.b16 %v234
    %v804 = vunpack.c.l.b16 %v235
    %v805 = vunpack.c.h.b16 %v235
    %v806 = vunpack.c.l.b16 %v236
    %v807 = vunpack.c.h.b16 %v236
    %v808 = vunpack.c.l.b16 %v237
    %v809 = vunpack.c.h.b16 %v237
    %v810 = vunpack.c.l.b16 %v238
    %v811 = vunpack.c.h.b16 %v238
    %v812 = vunpack.c.l.b16 %v239
    %v813 = vunpack.c.h.b16 %v239
    %v814 = vunpack.c.l.b16 %v240
    %v815 = vunpack.c.h.b16 %v240
    %v816 = vunpack.c.l.b16 %v241
    %v817 = vunpack.c.h.b16 %v241
    %v818 = vunpack.c.l.b16 %v242
    %v819 = vunpack.c.h.b16 %v242
    %v820 = vunpack.c.l.b16 %v243
    %v821 = vunpack.c.h.b16 %v243
    %v822 = vunpack.c.l.b16 %v244
    %v823 = vunpack.c.h.b16 %v244
    %v824 = vunpack.c.l.b16 %v245
    %v825 = vunpack.c.h.b16 %v245
    %v826 = vunpack.c.l.b16 %v246
    %v827 = vunpack.c.h.b16 %v246
    %v828 = vunpack.c.l.b16 %v247
    %v829 = vunpack.c.h.b16 %v247
    %v830 = vunpack.c.l.b16 %v248
    %v831 = vunpack.c.h.b16 %v248
    %v832 = vunpack.c.l.b16 %v249
    %v833 = vunpack.c.h.b16 %v249
    %v834 = vunpack.c.l.b16 %v250
    %v835 = vunpack.c.h.b16 %v250
    %v836 = vunpack.c.l.b16 %v251
    %v837 = vunpack.c.h.b16 %v251
    %v838 = vunpack.c.l.b16 %v252
    %v839 = vunpack.c.h.b16 %v252
    %v840 = vunpack.c.l.b16 %v253
    %v841 = vunpack.c.h.b16 %v253
    %v842 = vunpack.c.l.b16 %v254
    %v843 = vunpack.c.h.b16 %v254
    %v844 = vunpack.c.l.b16 %v255
    %v845 = vunpack.c.h.b16 %v255
    %v846 = vunpack.c.l.b16 %v256
    %v847 = vunpack.c.h.b16 %v256
    %v848 = vunpack.c.l.b16 %v257
    %v849 = vunpack.c.h.b16 %v257
    %v850 = vunpack.c.l.b16 %v258
    %v851 = vunpack.c.h.b16 %v258
    %v852 = vunpack.c.l.b16 %v259
    %v853 = vunpack.c.h.b16 %v259
    %v854 = vunpack.c.l.b16 %v260
    %v855 = vunpack.c.h.b16 %v260
    %v856 = vunpack.c.l.b16 %v261
    %v857 = vunpack.c.h.b16 %v261
    %v858 = vunpack.c.l.b16 %v262
    %v859 = vunpack.c.h.b16 %v262
    %v860 = vunpack.c.l.b16 %v263
    %v861 = vunpack.c.h.b16 %v263
    %v862 = vunpack.c.l.b16 %v264
    %v863 = vunpack.c.h.b16 %v264
    %v864 = vunpack.c.l.b16 %v265
    %v865 = vunpack.c.h.b16 %v265
    %v866 = vunpack.c.l.b16 %v266
    %v867 = vunpack.c.h.b16 %v266
    %v868 = vunpack.c.l.b16 %v267
    %v869 = vunpack.c.h.b16 %v267
    %v870 = vunpack.c.l.b16 %v268
    %v871 = vunpack.c.h.b16 %v268
    %v872 = vunpack.c.l.b16 %v269
    %v873 = vunpack.c.h.b16 %v269
    %v874 = vunpack.c.l.b16 %v270
    %v875 = vunpack.c.h.b16 %v270
    %v876 = vunpack.c.l.b16 %v271
    %v877 = vunpack.c.h.b16 %v271
    %v878 = vunpack.c.l.b16 %v272
    %v879 = vunpack.c.h.b16 %v272
    %v880 = vunpack.c.l.b16 %v273
    %v881 = vunpack.c.h.b16 %v273
    %v882 = vunpack.c.l.b16 %v274
    %v883 = vunpack.c.h.b16 %v274
    %v884 = vunpack.c.l.b16 %v275
    %v885 = vunpack.c.h.b16 %v275
    %v886 = vunpack.c.l.b16 %v276
    %v887 = vunpack.c.h.b16 %v276
    %v888 = vunpack.c.l.b16 %v277
    %v889 = vunpack.c.h.b16 %v277
    %v890 = vunpack.c.l.b16 %v278
    %v891 = vunpack.c.h.b16 %v278
    %v892 = vunpack.c.l.b16 %v279
    %v893 = vunpack.c.h.b16 %v279
    %v894 = vunpack.c.l.b16 %v280
    %v895 = vunpack.c.h.b16 %v280
    %v896 = vunpack.c.l.b16 %v281
    %v897 = vunpack.c.h.b16 %v281
    %v898 = vunpack.c.l.b16 %v282
    %v899 = vunpack.c.h.b16 %v282
    %v900 = vunpack.c.l.b16 %v283
    %v901 = vunpack.c.h.b16 %v283
    %v902 = vunpack.c.l.b16 %v284
    %v903 = vunpack.c.h.b16 %v284
    %v904 = vunpack.c.l.b16 %v285
    %v905 = vunpack.c.h.b16 %v285
    %v906 = vunpack.c.l.b16 %v286
    %v907 = vunpack.c.h.b16 %v286
    %v908 = vunpack.c.l.b16 %v287
    %v909 = vunpack.c.h.b16 %v287
    %v910 = vpack.c.b16 %v522, %v518
    %v911 = vpack.c.b16 %v523, %v519
    %v912 = vpack.c.b16 %v524, %v520
    %v913 = vpack.c.b16 %v525, %v521
    %v914 = vpack.c.b16 %v530, %v526
    %v915 = vpack.c.b16 %v531, %v527
    %v916 = vpack.c.b16 %v532, %v528
    %v917 = vpack.c.b16 %v533, %v529
    %v918 = vpack.c.b16 %v538, %v534
    %v919 = vpack.c.b16 %v539, %v535
    %v920 = vpack.c.b16 %v540, %v536
    %v921 = vpack.c.b16 %v541, %v537
    %v922 = vpack.c.b16 %v546, %v542
    %v923 = vpack.c.b16 %v547, %v543
    %v924 = vpack.c.b16 %v548, %v544
    %v925 = vpack.c.b16 %v549, %v545
    %v926 = vpack.c.b16 %v554, %v550
    %v927 = vpack.c.b16 %v555, %v551
    %v928 = vpack.c.b16 %v556, %v552
    %v929 = vpack.c.b16 %v557, %v553
    %v930 = vpack.c.b16 %v562, %v558
    %v931 = vpack.c.b16 %v563, %v559
    %v932 = vpack.c.b16 %v564, %v560
    %v933 = vpack.c.b16 %v565, %v561
    %v934 = vpack.c.b16 %v570, %v566
    %v935 = vpack.c.b16 %v571, %v567
    %v936 = vpack.c.b16 %v572, %v568
    %v937 = vpack.c.b16 %v573, %v569
    %v938 = vpack.c.b16 %v578, %v574
    %v939 = vpack.c.b16 %v579, %v575
    %v940 = vpack.c.b16 %v580, %v576
    %v941 = vpack.c.b16 %v581, %v577
    %v942 = vpack.c.b16 %v586, %v582
    %v943 = vpack.c.b16 %v587, %v583
    %v944 = vpack.c.b16 %v588, %v584
    %v945 = vpack.c.b16 %v589, %v585
    %v946 = vpack.c.b16 %v594, %v590
    %v947 = vpack.c.b16 %v595, %v591
    %v948 = vpack.c.b16 %v596, %v592
    %v949 = vpack.c.b16 %v597, %v593
    %v950 = vpack.c.b16 %v602, %v598
    %v951 = vpack.c.b16 %v603, %v599
    %v952 = vpack.c.b16 %v604, %v600
    %v953 = vpack.c.b16 %v605, %v601
    %v954 = vpack.c.b16 %v610, %v606
    %v955 = vpack.c.b16 %v611, %v607
    %v956 = vpack.c.b16 %v612, %v608
    %v957 = vpack.c.b16 %v613, %v609
    %v958 = vpack.c.b16 %v618, %v614
    %v959 = vpack.c.b16 %v619, %v615
    %v960 = vpack.c.b16 %v620, %v616
    %v961 = vpack.c.b16 %v621, %v617
    %v962 = vpack.c.b16 %v626, %v622
    %v963 = vpack.c.b16 %v627, %v623
    %v964 = vpack.c.b16 %v628, %v624
    %v965 = vpack.c.b16 %v629, %v625
    %v966 = vpack.c.b16 %v634, %v630
    %v967 = vpack.c.b16 %v635, %v631
    %v968 = vpack.c.b16 %v636, %v632
    %v969 = vpack.c.b16 %v637, %v633
    %v970 = vpack.c.b16 %v642, %v638
    %v971 = vpack.c.b16 %v643, %v639
    %v972 = vpack.c.b16 %v644, %v640
    %v973 = vpack.c.b16 %v645, %v641
    %v974 = vpack.c.b16 %v650, %v646
    %v975 = vpack.c.b16 %v651, %v647
    %v976 = vpack.c.b16 %v652, %v648
    %v977 = vpack.c.b16 %v653, %v649
    %v978 = vpack.c.b16 %v658, %v654
    %v979 = vpack.c.b16 %v659, %v655
    %v980 = vpack.c.b16 %v660, %v656
    %v981 = vpack.c.b16 %v661, %v657
    %v982 = vpack.c.b16 %v666, %v662
    %v983 = vpack.c.b16 %v667, %v663
    %v984 = vpack.c.b16 %v668, %v664
    %v985 = vpack.c.b16 %v669, %v665
    %v986 = vpack.c.b16 %v674, %v670
    %v987 = vpack.c.b16 %v675, %v671
    %v988 = vpack.c.b16 %v676, %v672
    %v989 = vpack.c.b16 %v677, %v673
    %v990 = vpack.c.b16 %v682, %v678
    %v991 = vpack.c.b16 %v683, %v679
    %v992 = vpack.c.b16 %v684, %v680
    %v993 = vpack.c.b16 %v685, %v681
    %v994 = vpack.c.b16 %v690, %v686
    %v995 = vpack.c.b16 %v691, %v687
    %v996 = vpack.c.b16 %v692, %v688
    %v997 = vpack.c.b16 %v693, %v689
    %v998 = vpack.c.b16 %v698, %v694
    %v999 = vpack.c.b16 %v699, %v695
    %v1000 = vpack.c.b16 %v700, %v696
    %v1001 = vpack.c.b16 %v701, %v697
    %v1002 = vpack.c.b16 %v706, %v702
    %v1003 = vpack.c.b16 %v707, %v703
    %v1004 = vpack.c.b16 %v708, %v704
    %v1005 = vpack.c.b16 %v709, %v705
    %v1006 = vpack.c.b16 %v714, %v710
    %v1007 = vpack.c.b16 %v715, %v711
    %v1008 = vpack.c.b16 %v716, %v712
    %v1009 = vpack.c.b16 %v717, %v713
    %v1010 = vpack.c.b16 %v722, %v718
    %v1011 = vpack.c.b16 %v723, %v719
    %v1012 = vpack.c.b16 %v724, %v720
    %v1013 = vpack.c.b16 %v725, %v721
    %v1014 = vpack.c.b16 %v730, %v726
    %v1015 = vpack.c.b16 %v731, %v727
    %v1016 = vpack.c.b16 %v732, %v728
    %v1017 = vpack.c.b16 %v733, %v729
    %v1018 = vpack.c.b16 %v738, %v734
    %v1019 = vpack.c.b16 %v739, %v735
    %v1020 = vpack.c.b16 %v740, %v736
    %v1021 = vpack.c.b16 %v741, %v737
    %v1022 = vpack.c.b16 %v746, %v742
    %v1023 = vpack.c.b16 %v747, %v743
    %v1024 = vpack.c.b16 %v748, %v744
    %v1025 = vpack.c.b16 %v749, %v745
    %v1026 = vpack.c.b16 %v754, %v750
    %v1027 = vpack.c.b16 %v755, %v751
    %v1028 = vpack.c.b16 %v756, %v752
    %v1029 = vpack.c.b16 %v757, %v753
    %v1030 = vpack.c.b16 %v762, %v758
    %v1031 = vpack.c.b16 %v763, %v759
    %v1032 = vpack.c.b16 %v764, %v760
    %v1033 = vpack.c.b16 %v765, %v761
    %v1034 = vpack.c.b16 %v770, %v766
    %v1035 = vpack.c.b16 %v771, %v767
    %v1036 = vpack.c.b16 %v772, %v768
    %v1037 = vpack.c.b16 %v773, %v769
    %v1038 = vpack.c.b16 %v778, %v774
    %v1039 = vpack.c.b16 %v779, %v775
    %v1040 = vpack.c.b16 %v780, %v776
    %v1041 = vpack.c.b16 %v781, %v777
    %v1042 = vpack.c.b16 %v786, %v782
    %v1043 = vpack.c.b16 %v787, %v783
    %v1044 = vpack.c.b16 %v788, %v784
    %v1045 = vpack.c.b16 %v789, %v785
    %v1046 = vpack.c.b16 %v794, %v790
    %v1047 = vpack.c.b16 %v795, %v791
    %v1048 = vpack.c.b16 %v796, %v792
    %v1049 = vpack.c.b16 %v797, %v793
    %v1050 = vpack.c.b16 %v802, %v798
    %v1051 = vpack.c.b16 %v803, %v799
    %v1052 = vpack.c.b16 %v804, %v800
    %v1053 = vpack.c.b16 %v805, %v801
    %v1054 = vpack.c.b16 %v810, %v806
    %v1055 = vpack.c.b16 %v811, %v807
    %v1056 = vpack.c.b16 %v812, %v808
    %v1057 = vpack.c.b16 %v813, %v809
    %v1058 = vpack.c.b16 %v818, %v814
    %v1059 = vpack.c.b16 %v819, %v815
    %v1060 = vpack.c.b16 %v820, %v816
    %v1061 = vpack.c.b16 %v821, %v817
    %v1062 = vpack.c.b16 %v826, %v822
    %v1063 = vpack.c.b16 %v827, %v823
    %v1064 = vpack.c.b16 %v828, %v824
    %v1065 = vpack.c.b16 %v829, %v825
    %v1066 = vpack.c.b16 %v834, %v830
    %v1067 = vpack.c.b16 %v835, %v831
    %v1068 = vpack.c.b16 %v836, %v832
    %v1069 = vpack.c.b16 %v837, %v833
    %v1070 = vpack.c.b16 %v842, %v838
    %v1071 = vpack.c.b16 %v843, %v839
    %v1072 = vpack.c.b16 %v844, %v840
    %v1073 = vpack.c.b16 %v845, %v841
    %v1074 = vpack.c.b16 %v850, %v846
    %v1075 = vpack.c.b16 %v851, %v847
    %v1076 = vpack.c.b16 %v852, %v848
    %v1077 = vpack.c.b16 %v853, %v849
    %v1078 = vpack.c.b16 %v858, %v854
    %v1079 = vpack.c.b16 %v859, %v855
    %v1080 = vpack.c.b16 %v860, %v856
    %v1081 = vpack.c.b16 %v861, %v857
    %v1082 = vpack.c.b16 %v866, %v862
    %v1083 = vpack.c.b16 %v867, %v863
    %v1084 = vpack.c.b16 %v868, %v864
    %v1085 = vpack.c.b16 %v869, %v865
    %v1086 = vpack.c.b16 %v874, %v870
    %v1087 = vpack.c.b16 %v875, %v871
    %v1088 = vpack.c.b16 %v876, %v872
    %v1089 = vpack.c.b16 %v877, %v873
    %v1090 = vpack.c.b16 %v882, %v878
    %v1091 = vpack.c.b16 %v883, %v879
    %v1092 = vpack.c.b16 %v884, %v880
    %v1093 = vpack.c.b16 %v885, %v881
    %v1094 = vpack.c.b16 %v890, %v886
    %v1095 = vpack.c.b16 %v891, %v887
    %v1096 = vpack.c.b16 %v892, %v888
    %v1097 = vpack.c.b16 %v893, %v889
    %v1098 = vpack.c.b16 %v898, %v894
    %v1099 = vpack.c.b16 %v899, %v895
    %v1100 = vpack.c.b16 %v900, %v896
    %v1101 = vpack.c.b16 %v901, %v897
    %v1102 = vpack.c.b16 %v906, %v902
    %v1103 = vpack.c.b16 %v907, %v903
    %v1104 = vpack.c.b16 %v908, %v904
    %v1105 = vpack.c.b16 %v909, %v905
    %vm1302 = vcmask 130048
    %v1304 = vsel %vm1302, %v315, 0
    %1306 = vmatpush.bf16.msra.mxu0 %v938
    %1307 = vmatpush.bf16.msra.mxu0 %v934
    %1308 = vmatpush.bf16.msra.mxu0 %v930
    %1309 = vmatpush.bf16.msra.mxu0 %v926
    %1310 = vmatpush.bf16.msra.mxu0 %v922
    %1311 = vmatpush.bf16.msra.mxu0 %v918
    %1312 = vmatpush.bf16.msra.mxu0 %v914
    %1313 = vmatpush.bf16.msra.mxu0 %v910
    %1314 = vmatmul.bf16.gmra.mxu0 %v309
    %v1315 = vpop.f32.mrf.mxu0
    %v1316 = vadd.f32 %v290, %v1315
    %v1317 = vpop.f32.mrf.mxu0
    %1318 = vdwg.mxu0
    %1319 = vmatpush.bf16.msra.mxu0 %v970
    %1320 = vmatpush.bf16.msra.mxu0 %v966
    %1321 = vmatpush.bf16.msra.mxu0 %v962
    %1322 = vmatpush.bf16.msra.mxu0 %v958
    %1323 = vmatpush.bf16.msra.mxu0 %v954
    %1324 = vmatpush.bf16.msra.mxu0 %v950
    %1325 = vmatpush.bf16.msra.mxu0 %v946
    %1326 = vmatpush.bf16.msra.mxu0 %v942
    %1327 = vmatmul.bf16.gmra.mxu0 %v310
    %v1328 = vpop.f32.mrf.mxu0
    %v1329 = vadd.f32 %v1316, %v1328
    %v1330 = vpop.f32.mrf.mxu0
    %1331 = vdwg.mxu0
    %1332 = vmatpush.bf16.msra.mxu0 %v1002
    %1333 = vmatpush.bf16.msra.mxu0 %v998
    %1334 = vmatpush.bf16.msra.mxu0 %v994
    %1335 = vmatpush.bf16.msra.mxu0 %v990
    %1336 = vmatpush.bf16.msra.mxu0 %v986
    %1337 = vmatpush.bf16.msra.mxu0 %v982
    %1338 = vmatpush.bf16.msra.mxu0 %v978
    %1339 = vmatpush.bf16.msra.mxu0 %v974
    %1340 = vmatmul.bf16.gmra.mxu0 %v311
    %v1341 = vpop.f32.mrf.mxu0
    %v1342 = vadd.f32 %v1329, %v1341
    %v1343 = vpop.f32.mrf.mxu0
    %1344 = vdwg.mxu0
    %1345 = vmatpush.bf16.msra.mxu0 %v1034
    %1346 = vmatpush.bf16.msra.mxu0 %v1030
    %1347 = vmatpush.bf16.msra.mxu0 %v1026
    %1348 = vmatpush.bf16.msra.mxu0 %v1022
    %1349 = vmatpush.bf16.msra.mxu0 %v1018
    %1350 = vmatpush.bf16.msra.mxu0 %v1014
    %1351 = vmatpush.bf16.msra.mxu0 %v1010
    %1352 = vmatpush.bf16.msra.mxu0 %v1006
    %1353 = vmatmul.bf16.gmra.mxu0 %v312
    %v1354 = vpop.f32.mrf.mxu0
    %v1355 = vadd.f32 %v1342, %v1354
    %v1356 = vpop.f32.mrf.mxu0
    %1357 = vdwg.mxu0
    %1358 = vmatpush.bf16.msra.mxu0 %v1066
    %1359 = vmatpush.bf16.msra.mxu0 %v1062
    %1360 = vmatpush.bf16.msra.mxu0 %v1058
    %1361 = vmatpush.bf16.msra.mxu0 %v1054
    %1362 = vmatpush.bf16.msra.mxu0 %v1050
    %1363 = vmatpush.bf16.msra.mxu0 %v1046
    %1364 = vmatpush.bf16.msra.mxu0 %v1042
    %1365 = vmatpush.bf16.msra.mxu0 %v1038
    %1366 = vmatmul.bf16.gmra.mxu0 %v313
    %v1367 = vpop.f32.mrf.mxu0
    %v1368 = vadd.f32 %v1355, %v1367
    %v1369 = vpop.f32.mrf.mxu0
    %1370 = vdwg.mxu0
    %1371 = vmatpush.bf16.msra.mxu0 %v1098
    %1372 = vmatpush.bf16.msra.mxu0 %v1094
    %1373 = vmatpush.bf16.msra.mxu0 %v1090
    %1374 = vmatpush.bf16.msra.mxu0 %v1086
    %1375 = vmatpush.bf16.msra.mxu0 %v1082
    %1376 = vmatpush.bf16.msra.mxu0 %v1078
    %1377 = vmatpush.bf16.msra.mxu0 %v1074
    %1378 = vmatpush.bf16.msra.mxu0 %v1070
    %1379 = vmatmul.bf16.gmra.mxu0 %v314
    %v1380 = vpop.f32.mrf.mxu0
    %v1381 = vadd.f32 %v1368, %v1380
    %v1382 = vpop.f32.mrf.mxu0
    %1383 = vdwg.mxu0
    %1384 = vmatpush.bf16.msra.mxu0 0
    %1385 = vmatpush.bf16.msra.mxu0 0
    %1386 = vmatpush.bf16.msra.mxu0 0
    %1387 = vmatpush.bf16.msra.mxu0 0
    %1388 = vmatpush.bf16.msra.mxu0 0
    %1389 = vmatpush.bf16.msra.mxu0 0
    %1390 = vmatpush.bf16.msra.mxu0 0
    %1391 = vmatpush.bf16.msra.mxu0 %v1102
    %1392 = vmatmul.bf16.gmra.mxu0 %v1304
    %v1393 = vpop.f32.mrf.mxu0
    %v1394 = vadd.f32 %v1381, %v1393
    %v1395 = vpop.f32.mrf.mxu0
    %1396 = vdwg.mxu0
    %1397 = vmatpush.bf16.msra.mxu0 %v939
    %1398 = vmatpush.bf16.msra.mxu0 %v935
    %1399 = vmatpush.bf16.msra.mxu0 %v931
    %1400 = vmatpush.bf16.msra.mxu0 %v927
    %1401 = vmatpush.bf16.msra.mxu0 %v923
    %1402 = vmatpush.bf16.msra.mxu0 %v919
    %1403 = vmatpush.bf16.msra.mxu0 %v915
    %1404 = vmatpush.bf16.msra.mxu0 %v911
    %1405 = vmatmul.bf16.gmra.mxu0 %v309
    %v1406 = vpop.f32.mrf.mxu0
    %v1407 = vadd.f32 %v291, %v1406
    %v1408 = vpop.f32.mrf.mxu0
    %1409 = vdwg.mxu0
    %1410 = vmatpush.bf16.msra.mxu0 %v971
    %1411 = vmatpush.bf16.msra.mxu0 %v967
    %1412 = vmatpush.bf16.msra.mxu0 %v963
    %1413 = vmatpush.bf16.msra.mxu0 %v959
    %1414 = vmatpush.bf16.msra.mxu0 %v955
    %1415 = vmatpush.bf16.msra.mxu0 %v951
    %1416 = vmatpush.bf16.msra.mxu0 %v947
    %1417 = vmatpush.bf16.msra.mxu0 %v943
    %1418 = vmatmul.bf16.gmra.mxu0 %v310
    %v1419 = vpop.f32.mrf.mxu0
    %v1420 = vadd.f32 %v1407, %v1419
    %v1421 = vpop.f32.mrf.mxu0
    %1422 = vdwg.mxu0
    %1423 = vmatpush.bf16.msra.mxu0 %v1003
    %1424 = vmatpush.bf16.msra.mxu0 %v999
    %1425 = vmatpush.bf16.msra.mxu0 %v995
    %1426 = vmatpush.bf16.msra.mxu0 %v991
    %1427 = vmatpush.bf16.msra.mxu0 %v987
    %1428 = vmatpush.bf16.msra.mxu0 %v983
    %1429 = vmatpush.bf16.msra.mxu0 %v979
    %1430 = vmatpush.bf16.msra.mxu0 %v975
    %1431 = vmatmul.bf16.gmra.mxu0 %v311
    %v1432 = vpop.f32.mrf.mxu0
    %v1433 = vadd.f32 %v1420, %v1432
    %v1434 = vpop.f32.mrf.mxu0
    %1435 = vdwg.mxu0
    %1436 = vmatpush.bf16.msra.mxu0 %v1035
    %1437 = vmatpush.bf16.msra.mxu0 %v1031
    %1438 = vmatpush.bf16.msra.mxu0 %v1027
    %1439 = vmatpush.bf16.msra.mxu0 %v1023
    %1440 = vmatpush.bf16.msra.mxu0 %v1019
    %1441 = vmatpush.bf16.msra.mxu0 %v1015
    %1442 = vmatpush.bf16.msra.mxu0 %v1011
    %1443 = vmatpush.bf16.msra.mxu0 %v1007
    %1444 = vmatmul.bf16.gmra.mxu0 %v312
    %v1445 = vpop.f32.mrf.mxu0
    %v1446 = vadd.f32 %v1433, %v1445
    %v1447 = vpop.f32.mrf.mxu0
    %1448 = vdwg.mxu0
    %1449 = vmatpush.bf16.msra.mxu0 %v1067
    %1450 = vmatpush.bf16.msra.mxu0 %v1063
    %1451 = vmatpush.bf16.msra.mxu0 %v1059
    %1452 = vmatpush.bf16.msra.mxu0 %v1055
    %1453 = vmatpush.bf16.msra.mxu0 %v1051
    %1454 = vmatpush.bf16.msra.mxu0 %v1047
    %1455 = vmatpush.bf16.msra.mxu0 %v1043
    %1456 = vmatpush.bf16.msra.mxu0 %v1039
    %1457 = vmatmul.bf16.gmra.mxu0 %v313
    %v1458 = vpop.f32.mrf.mxu0
    %v1459 = vadd.f32 %v1446, %v1458
    %v1460 = vpop.f32.mrf.mxu0
    %1461 = vdwg.mxu0
    %1462 = vmatpush.bf16.msra.mxu0 %v1099
    %1463 = vmatpush.bf16.msra.mxu0 %v1095
    %1464 = vmatpush.bf16.msra.mxu0 %v1091
    %1465 = vmatpush.bf16.msra.mxu0 %v1087
    %1466 = vmatpush.bf16.msra.mxu0 %v1083
    %1467 = vmatpush.bf16.msra.mxu0 %v1079
    %1468 = vmatpush.bf16.msra.mxu0 %v1075
    %1469 = vmatpush.bf16.msra.mxu0 %v1071
    %1470 = vmatmul.bf16.gmra.mxu0 %v314
    %v1471 = vpop.f32.mrf.mxu0
    %v1472 = vadd.f32 %v1459, %v1471
    %v1473 = vpop.f32.mrf.mxu0
    %1474 = vdwg.mxu0
    %1475 = vmatpush.bf16.msra.mxu0 0
    %1476 = vmatpush.bf16.msra.mxu0 0
    %1477 = vmatpush.bf16.msra.mxu0 0
    %1478 = vmatpush.bf16.msra.mxu0 0
    %1479 = vmatpush.bf16.msra.mxu0 0
    %1480 = vmatpush.bf16.msra.mxu0 0
    %1481 = vmatpush.bf16.msra.mxu0 0
    %1482 = vmatpush.bf16.msra.mxu0 %v1103
    %1483 = vmatmul.bf16.gmra.mxu0 %v1304
    %v1484 = vpop.f32.mrf.mxu0
    %v1485 = vadd.f32 %v1472, %v1484
    %v1486 = vpop.f32.mrf.mxu0
    %1487 = vdwg.mxu0
    %1488 = vmatpush.bf16.msra.mxu0 %v940
    %1489 = vmatpush.bf16.msra.mxu0 %v936
    %1490 = vmatpush.bf16.msra.mxu0 %v932
    %1491 = vmatpush.bf16.msra.mxu0 %v928
    %1492 = vmatpush.bf16.msra.mxu0 %v924
    %1493 = vmatpush.bf16.msra.mxu0 %v920
    %1494 = vmatpush.bf16.msra.mxu0 %v916
    %1495 = vmatpush.bf16.msra.mxu0 %v912
    %1496 = vmatmul.bf16.gmra.mxu0 %v309
    %v1497 = vpop.f32.mrf.mxu0
    %v1498 = vadd.f32 %v292, %v1497
    %v1499 = vpop.f32.mrf.mxu0
    %1500 = vdwg.mxu0
    %1501 = vmatpush.bf16.msra.mxu0 %v972
    %1502 = vmatpush.bf16.msra.mxu0 %v968
    %1503 = vmatpush.bf16.msra.mxu0 %v964
    %1504 = vmatpush.bf16.msra.mxu0 %v960
    %1505 = vmatpush.bf16.msra.mxu0 %v956
    %1506 = vmatpush.bf16.msra.mxu0 %v952
    %1507 = vmatpush.bf16.msra.mxu0 %v948
    %1508 = vmatpush.bf16.msra.mxu0 %v944
    %1509 = vmatmul.bf16.gmra.mxu0 %v310
    %v1510 = vpop.f32.mrf.mxu0
    %v1511 = vadd.f32 %v1498, %v1510
    %v1512 = vpop.f32.mrf.mxu0
    %1513 = vdwg.mxu0
    %1514 = vmatpush.bf16.msra.mxu0 %v1004
    %1515 = vmatpush.bf16.msra.mxu0 %v1000
    %1516 = vmatpush.bf16.msra.mxu0 %v996
    %1517 = vmatpush.bf16.msra.mxu0 %v992
    %1518 = vmatpush.bf16.msra.mxu0 %v988
    %1519 = vmatpush.bf16.msra.mxu0 %v984
    %1520 = vmatpush.bf16.msra.mxu0 %v980
    %1521 = vmatpush.bf16.msra.mxu0 %v976
    %1522 = vmatmul.bf16.gmra.mxu0 %v311
    %v1523 = vpop.f32.mrf.mxu0
    %v1524 = vadd.f32 %v1511, %v1523
    %v1525 = vpop.f32.mrf.mxu0
    %1526 = vdwg.mxu0
    %1527 = vmatpush.bf16.msra.mxu0 %v1036
    %1528 = vmatpush.bf16.msra.mxu0 %v1032
    %1529 = vmatpush.bf16.msra.mxu0 %v1028
    %1530 = vmatpush.bf16.msra.mxu0 %v1024
    %1531 = vmatpush.bf16.msra.mxu0 %v1020
    %1532 = vmatpush.bf16.msra.mxu0 %v1016
    %1533 = vmatpush.bf16.msra.mxu0 %v1012
    %1534 = vmatpush.bf16.msra.mxu0 %v1008
    %1535 = vmatmul.bf16.gmra.mxu0 %v312
    %v1536 = vpop.f32.mrf.mxu0
    %v1537 = vadd.f32 %v1524, %v1536
    %v1538 = vpop.f32.mrf.mxu0
    %1539 = vdwg.mxu0
    %1540 = vmatpush.bf16.msra.mxu0 %v1068
    %1541 = vmatpush.bf16.msra.mxu0 %v1064
    %1542 = vmatpush.bf16.msra.mxu0 %v1060
    %1543 = vmatpush.bf16.msra.mxu0 %v1056
    %1544 = vmatpush.bf16.msra.mxu0 %v1052
    %1545 = vmatpush.bf16.msra.mxu0 %v1048
    %1546 = vmatpush.bf16.msra.mxu0 %v1044
    %1547 = vmatpush.bf16.msra.mxu0 %v1040
    %1548 = vmatmul.bf16.gmra.mxu0 %v313
    %v1549 = vpop.f32.mrf.mxu0
    %v1550 = vadd.f32 %v1537, %v1549
    %v1551 = vpop.f32.mrf.mxu0
    %1552 = vdwg.mxu0
    %1553 = vmatpush.bf16.msra.mxu0 %v1100
    %1554 = vmatpush.bf16.msra.mxu0 %v1096
    %1555 = vmatpush.bf16.msra.mxu0 %v1092
    %1556 = vmatpush.bf16.msra.mxu0 %v1088
    %1557 = vmatpush.bf16.msra.mxu0 %v1084
    %1558 = vmatpush.bf16.msra.mxu0 %v1080
    %1559 = vmatpush.bf16.msra.mxu0 %v1076
    %1560 = vmatpush.bf16.msra.mxu0 %v1072
    %1561 = vmatmul.bf16.gmra.mxu0 %v314
    %v1562 = vpop.f32.mrf.mxu0
    %v1563 = vadd.f32 %v1550, %v1562
    %v1564 = vpop.f32.mrf.mxu0
    %1565 = vdwg.mxu0
    %1566 = vmatpush.bf16.msra.mxu0 0
    %1567 = vmatpush.bf16.msra.mxu0 0
    %1568 = vmatpush.bf16.msra.mxu0 0
    %1569 = vmatpush.bf16.msra.mxu0 0
    %1570 = vmatpush.bf16.msra.mxu0 0
    %1571 = vmatpush.bf16.msra.mxu0 0
    %1572 = vmatpush.bf16.msra.mxu0 0
    %1573 = vmatpush.bf16.msra.mxu0 %v1104
    %1574 = vmatmul.bf16.gmra.mxu0 %v1304
    %v1575 = vpop.f32.mrf.mxu0
    %v1576 = vadd.f32 %v1563, %v1575
    %v1577 = vpop.f32.mrf.mxu0
    %1578 = vdwg.mxu0
    %1579 = vmatpush.bf16.msra.mxu0 %v941
    %1580 = vmatpush.bf16.msra.mxu0 %v937
    %1581 = vmatpush.bf16.msra.mxu0 %v933
    %1582 = vmatpush.bf16.msra.mxu0 %v929
    %1583 = vmatpush.bf16.msra.mxu0 %v925
    %1584 = vmatpush.bf16.msra.mxu0 %v921
    %1585 = vmatpush.bf16.msra.mxu0 %v917
    %1586 = vmatpush.bf16.msra.mxu0 %v913
    %1587 = vmatmul.bf16.gmra.mxu0 %v309
    %v1588 = vpop.f32.mrf.mxu0
    %v1589 = vadd.f32 %v293, %v1588
    %v1590 = vpop.f32.mrf.mxu0
    %1591 = vdwg.mxu0
    %1592 = vmatpush.bf16.msra.mxu0 %v973
    %1593 = vmatpush.bf16.msra.mxu0 %v969
    %1594 = vmatpush.bf16.msra.mxu0 %v965
    %1595 = vmatpush.bf16.msra.mxu0 %v961
    %1596 = vmatpush.bf16.msra.mxu0 %v957
    %1597 = vmatpush.bf16.msra.mxu0 %v953
    %1598 = vmatpush.bf16.msra.mxu0 %v949
    %1599 = vmatpush.bf16.msra.mxu0 %v945
    %1600 = vmatmul.bf16.gmra.mxu0 %v310
    %v1601 = vpop.f32.mrf.mxu0
    %v1602 = vadd.f32 %v1589, %v1601
    %v1603 = vpop.f32.mrf.mxu0
    %1604 = vdwg.mxu0
    %1605 = vmatpush.bf16.msra.mxu0 %v1005
    %1606 = vmatpush.bf16.msra.mxu0 %v1001
    %1607 = vmatpush.bf16.msra.mxu0 %v997
    %1608 = vmatpush.bf16.msra.mxu0 %v993
    %1609 = vmatpush.bf16.msra.mxu0 %v989
    %1610 = vmatpush.bf16.msra.mxu0 %v985
    %1611 = vmatpush.bf16.msra.mxu0 %v981
    %1612 = vmatpush.bf16.msra.mxu0 %v977
    %1613 = vmatmul.bf16.gmra.mxu0 %v311
    %v1614 = vpop.f32.mrf.mxu0
    %v1615 = vadd.f32 %v1602, %v1614
    %v1616 = vpop.f32.mrf.mxu0
    %1617 = vdwg.mxu0
    %1618 = vmatpush.bf16.msra.mxu0 %v1037
    %1619 = vmatpush.bf16.msra.mxu0 %v1033
    %1620 = vmatpush.bf16.msra.mxu0 %v1029
    %1621 = vmatpush.bf16.msra.mxu0 %v1025
    %1622 = vmatpush.bf16.msra.mxu0 %v1021
    %1623 = vmatpush.bf16.msra.mxu0 %v1017
    %1624 = vmatpush.bf16.msra.mxu0 %v1013
    %1625 = vmatpush.bf16.msra.mxu0 %v1009
    %1626 = vmatmul.bf16.gmra.mxu0 %v312
    %v1627 = vpop.f32.mrf.mxu0
    %v1628 = vadd.f32 %v1615, %v1627
    %v1629 = vpop.f32.mrf.mxu0
    %1630 = vdwg.mxu0
    %1631 = vmatpush.bf16.msra.mxu0 %v1069
    %1632 = vmatpush.bf16.msra.mxu0 %v1065
    %1633 = vmatpush.bf16.msra.mxu0 %v1061
    %1634 = vmatpush.bf16.msra.mxu0 %v1057
    %1635 = vmatpush.bf16.msra.mxu0 %v1053
    %1636 = vmatpush.bf16.msra.mxu0 %v1049
    %1637 = vmatpush.bf16.msra.mxu0 %v1045
    %1638 = vmatpush.bf16.msra.mxu0 %v1041
    %1639 = vmatmul.bf16.gmra.mxu0 %v313
    %v1640 = vpop.f32.mrf.mxu0
    %v1641 = vadd.f32 %v1628, %v1640
    %v1642 = vpop.f32.mrf.mxu0
    %1643 = vdwg.mxu0
    %1644 = vmatpush.bf16.msra.mxu0 %v1101
    %1645 = vmatpush.bf16.msra.mxu0 %v1097
    %1646 = vmatpush.bf16.msra.mxu0 %v1093
    %1647 = vmatpush.bf16.msra.mxu0 %v1089
    %1648 = vmatpush.bf16.msra.mxu0 %v1085
    %1649 = vmatpush.bf16.msra.mxu0 %v1081
    %1650 = vmatpush.bf16.msra.mxu0 %v1077
    %1651 = vmatpush.bf16.msra.mxu0 %v1073
    %1652 = vmatmul.bf16.gmra.mxu0 %v314
    %v1653 = vpop.f32.mrf.mxu0
    %v1654 = vadd.f32 %v1641, %v1653
    %v1655 = vpop.f32.mrf.mxu0
    %1656 = vdwg.mxu0
    %1657 = vmatpush.bf16.msra.mxu0 0
    %1658 = vmatpush.bf16.msra.mxu0 0
    %1659 = vmatpush.bf16.msra.mxu0 0
    %1660 = vmatpush.bf16.msra.mxu0 0
    %1661 = vmatpush.bf16.msra.mxu0 0
    %1662 = vmatpush.bf16.msra.mxu0 0
    %1663 = vmatpush.bf16.msra.mxu0 0
    %1664 = vmatpush.bf16.msra.mxu0 %v1105
    %1665 = vmatmul.bf16.gmra.mxu0 %v1304
    %v1666 = vpop.f32.mrf.mxu0
    %v1667 = vadd.f32 %v1654, %v1666
    %v1668 = vpop.f32.mrf.mxu0
    %1669 = vdwg.mxu0
    %vm1670 = vcmp.gt.f32.partialorder %v1394, 0.0
    %vm1671 = vcmp.gt.f32.partialorder %v1485, 0.0
    %vm1672 = vcmp.gt.f32.partialorder %v1576, 0.0
    %vm1673 = vcmp.gt.f32.partialorder %v1667, 0.0
    %v1674 = vmul.f32 %v1394, 0.2
    %v1675 = vmul.f32 %v1485, 0.2
    %v1676 = vmul.f32 %v1576, 0.2
    %v1677 = vmul.f32 %v1667, 0.2
    %v1678 = vsel %vm1670, %v1394, %v1674
    %v1679 = vsel %vm1671, %v1485, %v1675
    %v1680 = vsel %vm1672, %v1576, %v1676
    %v1681 = vsel %vm1673, %v1667, %v1677
    %v1682 = vpack.c.bf16 %v1678, %v1678
    %v1683 = vpack.c.bf16 %v1679, %v1679
    %v1684 = vpack.c.bf16 %v1680, %v1680
    %v1685 = vpack.c.bf16 %v1681, %v1681
    %v1686 = vld [vmem:[#allocation8] sm:$0xff]
    %v1687 = vld [vmem:[#allocation8 + $0x8] sm:$0xff]
    %v1688 = vld [vmem:[#allocation8 + $0x10] sm:$0xff]
    %v1689 = vld [vmem:[#allocation8 + $0x18] sm:$0xff]
    %v1690 = vld [vmem:[#allocation8 + $0x20] sm:$0xff]
    %v1691 = vld [vmem:[#allocation8 + $0x28] sm:$0xff]
    %v1692 = vld [vmem:[#allocation8 + $0x30] sm:$0xff]
    %v1693 = vld [vmem:[#allocation8 + $0x38] sm:$0xff]
    %v1694 = vld [vmem:[#allocation8 + $0x40] sm:$0xff]
    %v1695 = vld [vmem:[#allocation8 + $0x48] sm:$0xff]
    %v1696 = vld [vmem:[#allocation8 + $0x50] sm:$0xff]
    %v1697 = vld [vmem:[#allocation8 + $0x58] sm:$0xff]
    %v1698 = vld [vmem:[#allocation8 + $0x60] sm:$0xff]
    %v1699 = vld [vmem:[#allocation8 + $0x68] sm:$0xff]
    %v1700 = vld [vmem:[#allocation8 + $0x70] sm:$0xff]
    %v1701 = vld [vmem:[#allocation8 + $0x78] sm:$0xff]
    %v1702 = vld [vmem:[#allocation8 + $0x80] sm:$0xff]
    %v1703 = vld [vmem:[#allocation8 + $0x88] sm:$0xff]
    %v1704 = vld [vmem:[#allocation8 + $0x90] sm:$0xff]
    %v1705 = vld [vmem:[#allocation8 + $0x98] sm:$0xff]
    %v1706 = vld [vmem:[#allocation8 + $0xa0] sm:$0xff]
    %v1707 = vld [vmem:[#allocation8 + $0xa8] sm:$0xff]
    %v1708 = vld [vmem:[#allocation8 + $0xb0] sm:$0xff]
    %v1709 = vld [vmem:[#allocation8 + $0xb8] sm:$0xff]
    %v1710 = vld [vmem:[#allocation8 + $0xc0] sm:$0xff]
    %v1711 = vld [vmem:[#allocation8 + $0xc8] sm:$0xff]
    %v1712 = vld [vmem:[#allocation8 + $0xd0] sm:$0xff]
    %v1713 = vld [vmem:[#allocation8 + $0xd8] sm:$0xff]
    %v1714 = vld [vmem:[#allocation8 + $0xe0] sm:$0xff]
    %v1715 = vld [vmem:[#allocation8 + $0xe8] sm:$0xff]
    %v1716 = vld [vmem:[#allocation8 + $0xf0] sm:$0xff]
    %v1717 = vld [vmem:[#allocation8 + $0xf8] sm:$0xff]
    %v1718 = vld [vmem:[#allocation8 + $0x100] sm:$0xff]
    %v1719 = vld [vmem:[#allocation8 + $0x108] sm:$0xff]
    %v1720 = vld [vmem:[#allocation8 + $0x110] sm:$0xff]
    %v1721 = vld [vmem:[#allocation8 + $0x118] sm:$0xff]
    %v1722 = vld [vmem:[#allocation8 + $0x120] sm:$0xff]
    %v1723 = vld [vmem:[#allocation8 + $0x128] sm:$0xff]
    %v1724 = vld [vmem:[#allocation8 + $0x130] sm:$0xff]
    %v1725 = vld [vmem:[#allocation8 + $0x138] sm:$0xff]
    %v1726 = vld [vmem:[#allocation8 + $0x140] sm:$0xff]
    %v1727 = vld [vmem:[#allocation8 + $0x148] sm:$0xff]
    %v1728 = vld [vmem:[#allocation8 + $0x150] sm:$0xff]
    %v1729 = vld [vmem:[#allocation8 + $0x158] sm:$0xff]
    %v1730 = vld [vmem:[#allocation8 + $0x160] sm:$0xff]
    %v1731 = vld [vmem:[#allocation8 + $0x168] sm:$0xff]
    %v1732 = vld [vmem:[#allocation8 + $0x170] sm:$0xff]
    %v1733 = vld [vmem:[#allocation8 + $0x178] sm:$0xff]
    %v1734 = vld [vmem:[#allocation8 + $0x180] sm:$0xff]
    %v1735 = vld [vmem:[#allocation8 + $0x188] sm:$0xff]
    %v1736 = vld [vmem:[#allocation8 + $0x190] sm:$0xff]
    %v1737 = vld [vmem:[#allocation8 + $0x198] sm:$0xff]
    %v1738 = vld [vmem:[#allocation8 + $0x1a0] sm:$0xff]
    %v1739 = vld [vmem:[#allocation8 + $0x1a8] sm:$0xff]
    %v1740 = vld [vmem:[#allocation8 + $0x1b0] sm:$0xff]
    %v1741 = vld [vmem:[#allocation8 + $0x1b8] sm:$0xff]
    %v1742 = vld [vmem:[#allocation8 + $0x1c0] sm:$0xff]
    %v1743 = vld [vmem:[#allocation8 + $0x1c8] sm:$0xff]
    %v1744 = vld [vmem:[#allocation8 + $0x1d0] sm:$0xff]
    %v1745 = vld [vmem:[#allocation8 + $0x1d8] sm:$0xff]
    %v1746 = vld [vmem:[#allocation8 + $0x1e0] sm:$0xff]
    %v1747 = vld [vmem:[#allocation8 + $0x1e8] sm:$0xff]
    %v1748 = vld [vmem:[#allocation8 + $0x1f0] sm:$0xff]
    %v1749 = vld [vmem:[#allocation8 + $0x1f8] sm:$0xff]
    %v1750 = vld [vmem:[%s4] sm:$0x3]
    %v1752 = vperm.slane %v1750, 0
    %v1753 = vperm.slane %v1750, 1
    %v1820 = vunpack.c.l.b16 %v1686
    %v1821 = vunpack.c.h.b16 %v1686
    %v1822 = vunpack.c.l.b16 %v1687
    %v1823 = vunpack.c.h.b16 %v1687
    %v1824 = vunpack.c.l.b16 %v1688
    %v1825 = vunpack.c.h.b16 %v1688
    %v1826 = vunpack.c.l.b16 %v1689
    %v1827 = vunpack.c.h.b16 %v1689
    %v1828 = vunpack.c.l.b16 %v1690
    %v1829 = vunpack.c.h.b16 %v1690
    %v1830 = vunpack.c.l.b16 %v1691
    %v1831 = vunpack.c.h.b16 %v1691
    %v1832 = vunpack.c.l.b16 %v1692
    %v1833 = vunpack.c.h.b16 %v1692
    %v1834 = vunpack.c.l.b16 %v1693
    %v1835 = vunpack.c.h.b16 %v1693
    %v1836 = vunpack.c.l.b16 %v1694
    %v1837 = vunpack.c.h.b16 %v1694
    %v1838 = vunpack.c.l.b16 %v1695
    %v1839 = vunpack.c.h.b16 %v1695
    %v1840 = vunpack.c.l.b16 %v1696
    %v1841 = vunpack.c.h.b16 %v1696
    %v1842 = vunpack.c.l.b16 %v1697
    %v1843 = vunpack.c.h.b16 %v1697
    %v1844 = vunpack.c.l.b16 %v1698
    %v1845 = vunpack.c.h.b16 %v1698
    %v1846 = vunpack.c.l.b16 %v1699
    %v1847 = vunpack.c.h.b16 %v1699
    %v1848 = vunpack.c.l.b16 %v1700
    %v1849 = vunpack.c.h.b16 %v1700
    %v1850 = vunpack.c.l.b16 %v1701
    %v1851 = vunpack.c.h.b16 %v1701
    %v1852 = vunpack.c.l.b16 %v1702
    %v1853 = vunpack.c.h.b16 %v1702
    %v1854 = vunpack.c.l.b16 %v1703
    %v1855 = vunpack.c.h.b16 %v1703
    %v1856 = vunpack.c.l.b16 %v1704
    %v1857 = vunpack.c.h.b16 %v1704
    %v1858 = vunpack.c.l.b16 %v1705
    %v1859 = vunpack.c.h.b16 %v1705
    %v1860 = vunpack.c.l.b16 %v1706
    %v1861 = vunpack.c.h.b16 %v1706
    %v1862 = vunpack.c.l.b16 %v1707
    %v1863 = vunpack.c.h.b16 %v1707
    %v1864 = vunpack.c.l.b16 %v1708
    %v1865 = vunpack.c.h.b16 %v1708
    %v1866 = vunpack.c.l.b16 %v1709
    %v1867 = vunpack.c.h.b16 %v1709
    %v1868 = vunpack.c.l.b16 %v1710
    %v1869 = vunpack.c.h.b16 %v1710
    %v1870 = vunpack.c.l.b16 %v1711
    %v1871 = vunpack.c.h.b16 %v1711
    %v1872 = vunpack.c.l.b16 %v1712
    %v1873 = vunpack.c.h.b16 %v1712
    %v1874 = vunpack.c.l.b16 %v1713
    %v1875 = vunpack.c.h.b16 %v1713
    %v1876 = vunpack.c.l.b16 %v1714
    %v1877 = vunpack.c.h.b16 %v1714
    %v1878 = vunpack.c.l.b16 %v1715
    %v1879 = vunpack.c.h.b16 %v1715
    %v1880 = vunpack.c.l.b16 %v1716
    %v1881 = vunpack.c.h.b16 %v1716
    %v1882 = vunpack.c.l.b16 %v1717
    %v1883 = vunpack.c.h.b16 %v1717
    %v1884 = vunpack.c.l.b16 %v1718
    %v1885 = vunpack.c.h.b16 %v1718
    %v1886 = vunpack.c.l.b16 %v1719
    %v1887 = vunpack.c.h.b16 %v1719
    %v1888 = vunpack.c.l.b16 %v1720
    %v1889 = vunpack.c.h.b16 %v1720
    %v1890 = vunpack.c.l.b16 %v1721
    %v1891 = vunpack.c.h.b16 %v1721
    %v1892 = vunpack.c.l.b16 %v1722
    %v1893 = vunpack.c.h.b16 %v1722
    %v1894 = vunpack.c.l.b16 %v1723
    %v1895 = vunpack.c.h.b16 %v1723
    %v1896 = vunpack.c.l.b16 %v1724
    %v1897 = vunpack.c.h.b16 %v1724
    %v1898 = vunpack.c.l.b16 %v1725
    %v1899 = vunpack.c.h.b16 %v1725
    %v1900 = vunpack.c.l.b16 %v1726
    %v1901 = vunpack.c.h.b16 %v1726
    %v1902 = vunpack.c.l.b16 %v1727
    %v1903 = vunpack.c.h.b16 %v1727
    %v1904 = vunpack.c.l.b16 %v1728
    %v1905 = vunpack.c.h.b16 %v1728
    %v1906 = vunpack.c.l.b16 %v1729
    %v1907 = vunpack.c.h.b16 %v1729
    %v1908 = vunpack.c.l.b16 %v1730
    %v1909 = vunpack.c.h.b16 %v1730
    %v1910 = vunpack.c.l.b16 %v1731
    %v1911 = vunpack.c.h.b16 %v1731
    %v1912 = vunpack.c.l.b16 %v1732
    %v1913 = vunpack.c.h.b16 %v1732
    %v1914 = vunpack.c.l.b16 %v1733
    %v1915 = vunpack.c.h.b16 %v1733
    %v1916 = vunpack.c.l.b16 %v1734
    %v1917 = vunpack.c.h.b16 %v1734
    %v1918 = vunpack.c.l.b16 %v1735
    %v1919 = vunpack.c.h.b16 %v1735
    %v1920 = vunpack.c.l.b16 %v1736
    %v1921 = vunpack.c.h.b16 %v1736
    %v1922 = vunpack.c.l.b16 %v1737
    %v1923 = vunpack.c.h.b16 %v1737
    %v1924 = vunpack.c.l.b16 %v1738
    %v1925 = vunpack.c.h.b16 %v1738
    %v1926 = vunpack.c.l.b16 %v1739
    %v1927 = vunpack.c.h.b16 %v1739
    %v1928 = vunpack.c.l.b16 %v1740
    %v1929 = vunpack.c.h.b16 %v1740
    %v1930 = vunpack.c.l.b16 %v1741
    %v1931 = vunpack.c.h.b16 %v1741
    %v1932 = vunpack.c.l.b16 %v1742
    %v1933 = vunpack.c.h.b16 %v1742
    %v1934 = vunpack.c.l.b16 %v1743
    %v1935 = vunpack.c.h.b16 %v1743
    %v1936 = vunpack.c.l.b16 %v1744
    %v1937 = vunpack.c.h.b16 %v1744
    %v1938 = vunpack.c.l.b16 %v1745
    %v1939 = vunpack.c.h.b16 %v1745
    %v1940 = vunpack.c.l.b16 %v1746
    %v1941 = vunpack.c.h.b16 %v1746
    %v1942 = vunpack.c.l.b16 %v1747
    %v1943 = vunpack.c.h.b16 %v1747
    %v1944 = vunpack.c.l.b16 %v1748
    %v1945 = vunpack.c.h.b16 %v1748
    %v1946 = vunpack.c.l.b16 %v1749
    %v1947 = vunpack.c.h.b16 %v1749
    %v1948 = vpack.c.b16 %v1822, %v1820
    %v1949 = vpack.c.b16 %v1823, %v1821
    %v1950 = vpack.c.b16 %v1826, %v1824
    %v1951 = vpack.c.b16 %v1827, %v1825
    %v1952 = vpack.c.b16 %v1830, %v1828
    %v1953 = vpack.c.b16 %v1831, %v1829
    %v1954 = vpack.c.b16 %v1834, %v1832
    %v1955 = vpack.c.b16 %v1835, %v1833
    %v1956 = vpack.c.b16 %v1838, %v1836
    %v1957 = vpack.c.b16 %v1839, %v1837
    %v1958 = vpack.c.b16 %v1842, %v1840
    %v1959 = vpack.c.b16 %v1843, %v1841
    %v1960 = vpack.c.b16 %v1846, %v1844
    %v1961 = vpack.c.b16 %v1847, %v1845
    %v1962 = vpack.c.b16 %v1850, %v1848
    %v1963 = vpack.c.b16 %v1851, %v1849
    %v1964 = vpack.c.b16 %v1854, %v1852
    %v1965 = vpack.c.b16 %v1855, %v1853
    %v1966 = vpack.c.b16 %v1858, %v1856
    %v1967 = vpack.c.b16 %v1859, %v1857
    %v1968 = vpack.c.b16 %v1862, %v1860
    %v1969 = vpack.c.b16 %v1863, %v1861
    %v1970 = vpack.c.b16 %v1866, %v1864
    %v1971 = vpack.c.b16 %v1867, %v1865
    %v1972 = vpack.c.b16 %v1870, %v1868
    %v1973 = vpack.c.b16 %v1871, %v1869
    %v1974 = vpack.c.b16 %v1874, %v1872
    %v1975 = vpack.c.b16 %v1875, %v1873
    %v1976 = vpack.c.b16 %v1878, %v1876
    %v1977 = vpack.c.b16 %v1879, %v1877
    %v1978 = vpack.c.b16 %v1882, %v1880
    %v1979 = vpack.c.b16 %v1883, %v1881
    %v1980 = vpack.c.b16 %v1886, %v1884
    %v1981 = vpack.c.b16 %v1887, %v1885
    %v1982 = vpack.c.b16 %v1890, %v1888
    %v1983 = vpack.c.b16 %v1891, %v1889
    %v1984 = vpack.c.b16 %v1894, %v1892
    %v1985 = vpack.c.b16 %v1895, %v1893
    %v1986 = vpack.c.b16 %v1898, %v1896
    %v1987 = vpack.c.b16 %v1899, %v1897
    %v1988 = vpack.c.b16 %v1902, %v1900
    %v1989 = vpack.c.b16 %v1903, %v1901
    %v1990 = vpack.c.b16 %v1906, %v1904
    %v1991 = vpack.c.b16 %v1907, %v1905
    %v1992 = vpack.c.b16 %v1910, %v1908
    %v1993 = vpack.c.b16 %v1911, %v1909
    %v1994 = vpack.c.b16 %v1914, %v1912
    %v1995 = vpack.c.b16 %v1915, %v1913
    %v1996 = vpack.c.b16 %v1918, %v1916
    %v1997 = vpack.c.b16 %v1919, %v1917
    %v1998 = vpack.c.b16 %v1922, %v1920
    %v1999 = vpack.c.b16 %v1923, %v1921
    %v2000 = vpack.c.b16 %v1926, %v1924
    %v2001 = vpack.c.b16 %v1927, %v1925
    %v2002 = vpack.c.b16 %v1930, %v1928
    %v2003 = vpack.c.b16 %v1931, %v1929
    %v2004 = vpack.c.b16 %v1934, %v1932
    %v2005 = vpack.c.b16 %v1935, %v1933
    %v2006 = vpack.c.b16 %v1938, %v1936
    %v2007 = vpack.c.b16 %v1939, %v1937
    %v2008 = vpack.c.b16 %v1942, %v1940
    %v2009 = vpack.c.b16 %v1943, %v1941
    %v2010 = vpack.c.b16 %v1946, %v1944
    %v2011 = vpack.c.b16 %v1947, %v1945
    %2076 = vmatpush.bf16.msra.mxu0 %v1962
    %2077 = vmatpush.bf16.msra.mxu0 %v1960
    %2078 = vmatpush.bf16.msra.mxu0 %v1958
    %2079 = vmatpush.bf16.msra.mxu0 %v1956
    %2080 = vmatpush.bf16.msra.mxu0 %v1954
    %2081 = vmatpush.bf16.msra.mxu0 %v1952
    %2082 = vmatpush.bf16.msra.mxu0 %v1950
    %2083 = vmatpush.bf16.msra.mxu0 %v1948
    %2084 = vmatmul.bf16.gmra.mxu0 %v1682
    %v2085 = vpop.f32.mrf.mxu0
    %v2086 = vadd.f32 %v1752, %v2085
    %v2087 = vpop.f32.mrf.mxu0
    %2088 = vdwg.mxu0
    %2089 = vmatpush.bf16.msra.mxu0 %v1978
    %2090 = vmatpush.bf16.msra.mxu0 %v1976
    %2091 = vmatpush.bf16.msra.mxu0 %v1974
    %2092 = vmatpush.bf16.msra.mxu0 %v1972
    %2093 = vmatpush.bf16.msra.mxu0 %v1970
    %2094 = vmatpush.bf16.msra.mxu0 %v1968
    %2095 = vmatpush.bf16.msra.mxu0 %v1966
    %2096 = vmatpush.bf16.msra.mxu0 %v1964
    %2097 = vmatmul.bf16.gmra.mxu0 %v1683
    %v2098 = vpop.f32.mrf.mxu0
    %v2099 = vadd.f32 %v2086, %v2098
    %v2100 = vpop.f32.mrf.mxu0
    %2101 = vdwg.mxu0
    %2102 = vmatpush.bf16.msra.mxu0 %v1994
    %2103 = vmatpush.bf16.msra.mxu0 %v1992
    %2104 = vmatpush.bf16.msra.mxu0 %v1990
    %2105 = vmatpush.bf16.msra.mxu0 %v1988
    %2106 = vmatpush.bf16.msra.mxu0 %v1986
    %2107 = vmatpush.bf16.msra.mxu0 %v1984
    %2108 = vmatpush.bf16.msra.mxu0 %v1982
    %2109 = vmatpush.bf16.msra.mxu0 %v1980
    %2110 = vmatmul.bf16.gmra.mxu0 %v1684
    %v2111 = vpop.f32.mrf.mxu0
    %v2112 = vadd.f32 %v2099, %v2111
    %v2113 = vpop.f32.mrf.mxu0
    %2114 = vdwg.mxu0
    %2115 = vmatpush.bf16.msra.mxu0 %v2010
    %2116 = vmatpush.bf16.msra.mxu0 %v2008
    %2117 = vmatpush.bf16.msra.mxu0 %v2006
    %2118 = vmatpush.bf16.msra.mxu0 %v2004
    %2119 = vmatpush.bf16.msra.mxu0 %v2002
    %2120 = vmatpush.bf16.msra.mxu0 %v2000
    %2121 = vmatpush.bf16.msra.mxu0 %v1998
    %2122 = vmatpush.bf16.msra.mxu0 %v1996
    %2123 = vmatmul.bf16.gmra.mxu0 %v1685
    %v2124 = vpop.f32.mrf.mxu0
    %v2125 = vadd.f32 %v2112, %v2124
    %v2126 = vpop.f32.mrf.mxu0
    %2127 = vdwg.mxu0
    %2128 = vmatpush.bf16.msra.mxu0 %v1963
    %2129 = vmatpush.bf16.msra.mxu0 %v1961
    %2130 = vmatpush.bf16.msra.mxu0 %v1959
    %2131 = vmatpush.bf16.msra.mxu0 %v1957
    %2132 = vmatpush.bf16.msra.mxu0 %v1955
    %2133 = vmatpush.bf16.msra.mxu0 %v1953
    %2134 = vmatpush.bf16.msra.mxu0 %v1951
    %2135 = vmatpush.bf16.msra.mxu0 %v1949
    %2136 = vmatmul.bf16.gmra.mxu0 %v1682
    %v2137 = vpop.f32.mrf.mxu0
    %v2138 = vadd.f32 %v1753, %v2137
    %v2139 = vpop.f32.mrf.mxu0
    %2140 = vdwg.mxu0
    %2141 = vmatpush.bf16.msra.mxu0 %v1979
    %2142 = vmatpush.bf16.msra.mxu0 %v1977
    %2143 = vmatpush.bf16.msra.mxu0 %v1975
    %2144 = vmatpush.bf16.msra.mxu0 %v1973
    %2145 = vmatpush.bf16.msra.mxu0 %v1971
    %2146 = vmatpush.bf16.msra.mxu0 %v1969
    %2147 = vmatpush.bf16.msra.mxu0 %v1967
    %2148 = vmatpush.bf16.msra.mxu0 %v1965
    %2149 = vmatmul.bf16.gmra.mxu0 %v1683
    %v2150 = vpop.f32.mrf.mxu0
    %v2151 = vadd.f32 %v2138, %v2150
    %v2152 = vpop.f32.mrf.mxu0
    %2153 = vdwg.mxu0
    %2154 = vmatpush.bf16.msra.mxu0 %v1995
    %2155 = vmatpush.bf16.msra.mxu0 %v1993
    %2156 = vmatpush.bf16.msra.mxu0 %v1991
    %2157 = vmatpush.bf16.msra.mxu0 %v1989
    %2158 = vmatpush.bf16.msra.mxu0 %v1987
    %2159 = vmatpush.bf16.msra.mxu0 %v1985
    %2160 = vmatpush.bf16.msra.mxu0 %v1983
    %2161 = vmatpush.bf16.msra.mxu0 %v1981
    %2162 = vmatmul.bf16.gmra.mxu0 %v1684
    %v2163 = vpop.f32.mrf.mxu0
    %v2164 = vadd.f32 %v2151, %v2163
    %v2165 = vpop.f32.mrf.mxu0
    %2166 = vdwg.mxu0
    %2167 = vmatpush.bf16.msra.mxu0 %v2011
    %2168 = vmatpush.bf16.msra.mxu0 %v2009
    %2169 = vmatpush.bf16.msra.mxu0 %v2007
    %2170 = vmatpush.bf16.msra.mxu0 %v2005
    %2171 = vmatpush.bf16.msra.mxu0 %v2003
    %2172 = vmatpush.bf16.msra.mxu0 %v2001
    %2173 = vmatpush.bf16.msra.mxu0 %v1999
    %2174 = vmatpush.bf16.msra.mxu0 %v1997
    %2175 = vmatmul.bf16.gmra.mxu0 %v1685
    %v2176 = vpop.f32.mrf.mxu0
    %v2177 = vadd.f32 %v2164, %v2176
    %v2178 = vpop.f32.mrf.mxu0
    %2179 = vdwg.mxu0
    %vm2180 = vcmp.gt.f32.partialorder %v2125, 0.0
    %vm2181 = vcmp.gt.f32.partialorder %v2177, 0.0
    %v2182 = vmul.f32 %v2125, 0.2
    %v2183 = vmul.f32 %v2177, 0.2
    %v2184 = vsel %vm2180, %v2125, %v2182
    %v2185 = vsel %vm2181, %v2177, %v2183
    %v2186 = vld [vmem:[%s5] sm:$0x3]
    %v2188 = vperm.slane %v2186, 0
    %v2189 = vperm.slane %v2186, 1
    %v2192 = vmul.f32 %v2184, %v2188
    %v2193 = vmul.f32 %v2185, %v2189
    %v2194 = vadd.f32 %v2192, %v2193
    %2195 = vadd.xlane.f32.xlu0 %v2194
    %v2196 = vpop.xlane.xlu0 %2195
    %v2197 = vld [vmem:[#allocation2] sm:$0x1]
    %v2199 = vperm.slane %v2197, 0
    %v2201 = vadd.f32 %v2196, %v2199
    %v2202 = vsub.f32 0.0, %v2201
    %v2203 = vmul.f32 %v2202, 1.442695
    %v2204 = vpow.pop %v2203
    %v2205 = vadd.f32 %v2204, 1.0
    %v2206 = vrcp.pop %v2205
    %vm2207 = vcmask 7168
    %2208 = vst.msk [vmem:[%s7] sm:$0xff] %vm2207, %v2206
    // Predicated region
    $region46: #{tpu_custom_call.1} parent=1 // pred_check
      _
    $region47: #{tpu_custom_call.1} parent=1 // pred_check_branch
      %2210 = sbr.rel (0) target = $region49
    $region48: #{tpu_custom_call.1} parent=1 // pred_region
      _
    $region49: #{tpu_custom_call.1} parent=1 // pred_fallthru
      _
    // Predicated region
    $region50: #{tpu_custom_call.1} parent=1 // pred_check
      _
    $region51: #{tpu_custom_call.1} parent=1 // pred_check_branch
      %2212 = sbr.rel (0) target = $region53
    $region52: #{tpu_custom_call.1} parent=1 // pred_region
      _
    $region53: #{tpu_custom_call.1} parent=1 // pred_fallthru
      _
    %2213 = vsyncpa [#allocation4], 1
    %2214 = vsyncpa [#allocation6], 1
    %2215 = vsyncpa [#allocation9], 1

</llo_original>
